<compile_context>
chip_gen: v7x
topology: tpu7x:2x2x1
jax: 0.10.0
libtpu: 0.0.40
codegen_flags: <defaults>
</compile_context>

<pallas_src>
import jax
import jax.numpy as jnp
from jax.experimental import pallas as pl
from jax.experimental.pallas import tpu as pltpu

D = 512  # hidden size fixed by the module (512x512 params)


def _num_tensorcores() -> int:
    """2 TensorCores per chip on v7x; 1 on v5e/v6e."""
    try:
        kind = jax.devices()[0].device_kind.lower()
    except Exception:
        return 1
    return 2 if "v7" in kind else 1


def _pick_tm(batch: int, num_cores: int) -> int:
    """Sublane-aligned batch tile.

    Single-TC chips (v5e/v6e): largest tile up to 512 — one big grid step beats
    two small ones (per-step overhead ~0.35 us, no parallelism to gain).
    2-TC chips (v7x): additionally ensure >= num_cores grid steps so the
    'parallel' axis can be sharded across both TensorCores.
    """
    b8 = pl.cdiv(batch, 8) * 8
    tm = min(512, b8)
    if num_cores >= 2:
        steps = pl.cdiv(b8, tm)
        if steps < num_cores:
            tm = max(8, pl.cdiv(pl.cdiv(b8, num_cores), 8) * 8)
    return tm


def example_code_kernel(x_ref, mm1_ref, mm2_ref, linwt_ref, linb_ref, buf_ref, o_ref):
    # x arrives f32; cast to bf16 on the VPU (free filler under MXU work).
    x = x_ref[...].astype(jnp.bfloat16)   # (TM, D)
    mm1 = mm1_ref[...]                    # (D, D) bf16
    mm2 = mm2_ref[...]                    # (D, D) bf16
    linwt = linwt_ref[...]                # (D, D) bf16, (in, out) layout
    linb = linb_ref[...]                  # (1, D) f32
    buf = buf_ref[...]                    # (1, D) f32

    def lin(h_f32):
        # h @ W^T + b with W pre-transposed in the wrapper -> canonical dot.
        return jnp.dot(h_f32.astype(jnp.bfloat16), linwt,
                       preferred_element_type=jnp.float32) + linb

    # x = mm(x, mm_param); skip = x; x = relu(x)
    h = jnp.dot(x, mm1, preferred_element_type=jnp.float32)      # f32 (TM, D)
    skip = h
    h = jnp.maximum(h, 0.0)

    # x = mm(x, mm_param) + buffer
    h = jnp.dot(h.astype(jnp.bfloat16), mm1,
                preferred_element_type=jnp.float32) + buf

    # x = lin(x); x = relu(x); x = x + skip
    h = lin(h)
    h = jnp.maximum(h, 0.0) + skip

    # x = mm(x, mm_param2); x = lin(x)
    h = jnp.dot(h.astype(jnp.bfloat16), mm2,
                preferred_element_type=jnp.float32)
    h = lin(h)

    o_ref[...] = h.astype(o_ref.dtype)


def example_code_forward(x, mm_param, mm_param2, lin_w, lin_b, buffer):
    B, Din = x.shape
    assert Din == D

    tm = _pick_tm(B, _num_tensorcores())
    grid = (pl.cdiv(B, tm),)

    # One-time wrapper-side prep: bf16 MXU weights, lin_w transposed to
    # (in, out) so the kernel contracts on the canonical axis.
    mm1_bf = mm_param.astype(jnp.bfloat16)
    mm2_bf = mm_param2.astype(jnp.bfloat16)
    linwt_bf = lin_w.T.astype(jnp.bfloat16)          # (in, out)
    linb2 = lin_b.reshape(1, D).astype(jnp.float32)
    buffer2 = buffer.reshape(1, D).astype(jnp.float32)
    x_f32 = x.astype(jnp.float32)

    xblk = pl.BlockSpec((tm, D), lambda i: (i, 0))
    full = pl.BlockSpec((D, D), lambda i: (0, 0))    # resident: constant index_map
    row = pl.BlockSpec((1, D), lambda i: (0, 0))

    flops = 5 * 2 * B * D * D
    bytes_accessed = (B * D * 4          # x (f32 in)
                      + 3 * D * D * 2    # weights (bf16)
                      + 2 * D * 4        # bias + buffer (f32)
                      + B * D * 4)       # output (f32)

    out = pl.pallas_call(
        example_code_kernel,
        out_shape=jax.ShapeDtypeStruct((B, D), jnp.float32),
        grid_spec=pl.GridSpec(
            grid=grid,
            in_specs=[xblk, full, full, full, row, row],
            out_specs=xblk,
        ),
        compiler_params=pltpu.CompilerParams(
            dimension_semantics=("parallel",)),
        cost_estimate=pl.CostEstimate(
            flops=flops, transcendentals=0, bytes_accessed=bytes_accessed),
    )(x_f32, mm1_bf, mm2_bf, linwt_bf, linb2, buffer2)

    return out


def example_code_reference_mixed(x, mm_param, mm_param2, lin_w, lin_b, buffer):
    """Pure-JAX reference using the identical bf16-operand / f32-accumulate scheme."""
    bf, f32 = jnp.bfloat16, jnp.float32
    dot = lambda a, b: jnp.dot(a.astype(bf), b.astype(bf), preferred_element_type=f32)
    h = dot(x, mm_param)
    skip = h
    h = jnp.maximum(h, 0.0)
    h = dot(h, mm_param) + buffer.astype(f32)
    h = dot(h, lin_w.T) + lin_b.astype(f32)
    h = jnp.maximum(h, 0.0) + skip
    h = dot(h, mm_param2)
    h = dot(h, lin_w.T) + lin_b.astype(f32)
    return h


def example_code_reference_f32(x, mm_param, mm_param2, lin_w, lin_b, buffer):
    """Exact f32 math (matches the torch module's semantics)."""
    h = x @ mm_param
    skip = h
    h = jnp.maximum(h, 0.0)
    h = h @ mm_param + buffer
    h = h @ lin_w.T + lin_b
    h = jnp.maximum(h, 0.0) + skip
    h = h @ mm_param2
    h = h @ lin_w.T + lin_b
    return h


if __name__ == "__main__":
    key = jax.random.PRNGKey(0)
    k_x, k_mm1, k_mm2, k_w, k_b, k_buf = jax.random.split(key, 6)

    B = 12  # deliberately not a multiple of 8 to exercise the partial edge block
    x = jax.random.normal(k_x, (B, D), dtype=jnp.float32)

    # deterministic parameter init (shapes follow the module's __init__)
    mm_param = jax.random.normal(k_mm1, (D, D), dtype=jnp.float32)
    mm_param2 = jax.random.normal(k_mm2, (D, D), dtype=jnp.float32)
    bound = 1.0 / jnp.sqrt(D)
    lin_w = jax.random.uniform(k_w, (D, D), jnp.float32, -bound, bound)   # (out, in)
    lin_b = jax.random.uniform(k_b, (D,), jnp.float32, -bound, bound)
    buffer = 0.001 * jax.random.normal(k_buf, (D,), dtype=jnp.float32)

    out = example_code_forward(x, mm_param, mm_param2, lin_w, lin_b, buffer)
    out = jax.block_until_ready(out)
    assert out.shape == (B, D)

    # Strict relative-norm check against a reference doing the same mixed-precision math.
    ref_mixed = example_code_reference_mixed(x, mm_param, mm_param2, lin_w, lin_b, buffer)
    rel_mixed = jnp.linalg.norm(out - ref_mixed) / jnp.linalg.norm(ref_mixed)
    assert rel_mixed < 2e-3, f"mismatch vs mixed-precision reference: rel={rel_mixed}"

    # Loose check against the exact f32 reference (bf16 operands over 5 chained
    # 512-wide matmuls give ~0.5% relative error).
    ref_f32 = example_code_reference_f32(x, mm_param, mm_param2, lin_w, lin_b, buffer)
    rel = jnp.linalg.norm(out - ref_f32) / jnp.linalg.norm(ref_f32)
    assert rel < 0.05, f"bf16 drift vs f32 reference too large: {rel}"

    print("KERNEL_OK")
</pallas_src>

<mosaic_0001>
module attributes {stable_mosaic.version = 11 : i64} {
  func.func @example_code_kernel(%arg0: i32, %arg1: memref<16x512xf32, #tpu.memory_space<vmem>>, %arg2: memref<512x512xbf16, #tpu.memory_space<vmem>>, %arg3: memref<512x512xbf16, #tpu.memory_space<vmem>>, %arg4: memref<512x512xbf16, #tpu.memory_space<vmem>>, %arg5: memref<1x512xf32, #tpu.memory_space<vmem>>, %arg6: memref<1x512xf32, #tpu.memory_space<vmem>>, %arg7: memref<16x512xf32, #tpu.memory_space<vmem>>) attributes {dimension_semantics = [#tpu.dimension_semantics<parallel>], iteration_bounds = array<i64: 1>, scalar_prefetch = 0 : i64, scratch_operands = 0 : i64, tpu.core_type = #tpu.core_type<tc>, window_params = [{transform_indices = @transform_0, window_bounds = array<i64: 16, 512>}, {pipeline_mode = #tpu.pipeline_mode<synchronous>, transform_indices = @transform_1, window_bounds = array<i64: 512, 512>}, {pipeline_mode = #tpu.pipeline_mode<synchronous>, transform_indices = @transform_2, window_bounds = array<i64: 512, 512>}, {pipeline_mode = #tpu.pipeline_mode<synchronous>, transform_indices = @transform_3, window_bounds = array<i64: 512, 512>}, {pipeline_mode = #tpu.pipeline_mode<synchronous>, transform_indices = @transform_4, window_bounds = array<i64: 1, 512>}, {pipeline_mode = #tpu.pipeline_mode<synchronous>, transform_indices = @transform_5, window_bounds = array<i64: 1, 512>}, {transform_indices = @transform_6, window_bounds = array<i64: 16, 512>}]} {
    %c0 = arith.constant 0 : index
    %c0_0 = arith.constant 0 : index
    %0 = vector.load %arg1[%c0, %c0_0] : memref<16x512xf32, #tpu.memory_space<vmem>>, vector<16x512xf32>
    %1 = arith.truncf %0 : vector<16x512xf32> to vector<16x512xbf16>
    %c0_1 = arith.constant 0 : index
    %c0_2 = arith.constant 0 : index
    %2 = vector.load %arg2[%c0_1, %c0_2] : memref<512x512xbf16, #tpu.memory_space<vmem>>, vector<512x512xbf16>
    %c0_3 = arith.constant 0 : index
    %c0_4 = arith.constant 0 : index
    %3 = vector.load %arg3[%c0_3, %c0_4] : memref<512x512xbf16, #tpu.memory_space<vmem>>, vector<512x512xbf16>
    %c0_5 = arith.constant 0 : index
    %c0_6 = arith.constant 0 : index
    %4 = vector.load %arg4[%c0_5, %c0_6] : memref<512x512xbf16, #tpu.memory_space<vmem>>, vector<512x512xbf16>
    %c0_7 = arith.constant 0 : index
    %c0_8 = arith.constant 0 : index
    %5 = vector.load %arg5[%c0_7, %c0_8] : memref<1x512xf32, #tpu.memory_space<vmem>>, vector<1x512xf32>
    %c0_9 = arith.constant 0 : index
    %c0_10 = arith.constant 0 : index
    %6 = vector.load %arg6[%c0_9, %c0_10] : memref<1x512xf32, #tpu.memory_space<vmem>>, vector<1x512xf32>
    %cst = arith.constant dense<0.000000e+00> : vector<16x512xf32>
    %7 = tpu.matmul %1, %2, %cst {dimension_numbers = #tpu.dot_dimension_numbers<[1], [0], [0], [1], [0, 0, 1, 1], [], []>} : vector<16x512xbf16>, vector<512x512xbf16>, vector<16x512xf32> -> vector<16x512xf32>
    %cst_11 = arith.constant 0.000000e+00 : f32
    %8 = vector.broadcast %cst_11 : f32 to vector<16x512xf32>
    %9 = arith.maximumf %7, %8 : vector<16x512xf32>
    %10 = arith.truncf %9 : vector<16x512xf32> to vector<16x512xbf16>
    %cst_12 = arith.constant dense<0.000000e+00> : vector<16x512xf32>
    %11 = tpu.matmul %10, %2, %cst_12 {dimension_numbers = #tpu.dot_dimension_numbers<[1], [0], [0], [1], [0, 0, 1, 1], [], []>} : vector<16x512xbf16>, vector<512x512xbf16>, vector<16x512xf32> -> vector<16x512xf32>
    %12 = vector.broadcast %6 : vector<1x512xf32> to vector<16x512xf32>
    %13 = arith.addf %11, %12 : vector<16x512xf32>
    %14 = arith.truncf %13 : vector<16x512xf32> to vector<16x512xbf16>
    %cst_13 = arith.constant dense<0.000000e+00> : vector<16x512xf32>
    %15 = tpu.matmul %14, %4, %cst_13 {dimension_numbers = #tpu.dot_dimension_numbers<[1], [0], [0], [1], [0, 0, 1, 1], [], []>} : vector<16x512xbf16>, vector<512x512xbf16>, vector<16x512xf32> -> vector<16x512xf32>
    %16 = vector.broadcast %5 : vector<1x512xf32> to vector<16x512xf32>
    %17 = arith.addf %15, %16 : vector<16x512xf32>
    %cst_14 = arith.constant 0.000000e+00 : f32
    %18 = vector.broadcast %cst_14 : f32 to vector<16x512xf32>
    %19 = arith.maximumf %17, %18 : vector<16x512xf32>
    %20 = arith.addf %19, %7 : vector<16x512xf32>
    %21 = arith.truncf %20 : vector<16x512xf32> to vector<16x512xbf16>
    %cst_15 = arith.constant dense<0.000000e+00> : vector<16x512xf32>
    %22 = tpu.matmul %21, %3, %cst_15 {dimension_numbers = #tpu.dot_dimension_numbers<[1], [0], [0], [1], [0, 0, 1, 1], [], []>} : vector<16x512xbf16>, vector<512x512xbf16>, vector<16x512xf32> -> vector<16x512xf32>
    %23 = arith.truncf %22 : vector<16x512xf32> to vector<16x512xbf16>
    %cst_16 = arith.constant dense<0.000000e+00> : vector<16x512xf32>
    %24 = tpu.matmul %23, %4, %cst_16 {dimension_numbers = #tpu.dot_dimension_numbers<[1], [0], [0], [1], [0, 0, 1, 1], [], []>} : vector<16x512xbf16>, vector<512x512xbf16>, vector<16x512xf32> -> vector<16x512xf32>
    %25 = vector.broadcast %5 : vector<1x512xf32> to vector<16x512xf32>
    %26 = arith.addf %24, %25 : vector<16x512xf32>
    %c0_17 = arith.constant 0 : index
    %c0_18 = arith.constant 0 : index
    %27 = vector.load %arg7[%c0_17, %c0_18] : memref<16x512xf32, #tpu.memory_space<vmem>>, vector<16x512xf32>
    tpu.vector_store %arg7[%c0_17, %c0_18], %26 {strides = array<i32>} : memref<16x512xf32, #tpu.memory_space<vmem>>, vector<16x512xf32>,
    return
  }
  func.func @transform_0(%arg0: i32) -> (i32, i32) {
    %c0_i32 = arith.constant 0 : i32
    %c0_i32_0 = arith.constant 0 : i32
    return %arg0, %c0_i32 : i32, i32
  }
  func.func @transform_1(%arg0: i32) -> (i32, i32) {
    %c0_i32 = arith.constant 0 : i32
    %c0_i32_0 = arith.constant 0 : i32
    %c0_i32_1 = arith.constant 0 : i32
    return %c0_i32, %c0_i32_0 : i32, i32
  }
  func.func @transform_2(%arg0: i32) -> (i32, i32) {
    %c0_i32 = arith.constant 0 : i32
    %c0_i32_0 = arith.constant 0 : i32
    %c0_i32_1 = arith.constant 0 : i32
    return %c0_i32, %c0_i32_0 : i32, i32
  }
  func.func @transform_3(%arg0: i32) -> (i32, i32) {
    %c0_i32 = arith.constant 0 : i32
    %c0_i32_0 = arith.constant 0 : i32
    %c0_i32_1 = arith.constant 0 : i32
    return %c0_i32, %c0_i32_0 : i32, i32
  }
  func.func @transform_4(%arg0: i32) -> (i32, i32) {
    %c0_i32 = arith.constant 0 : i32
    %c0_i32_0 = arith.constant 0 : i32
    %c0_i32_1 = arith.constant 0 : i32
    return %c0_i32, %c0_i32_0 : i32, i32
  }
  func.func @transform_5(%arg0: i32) -> (i32, i32) {
    %c0_i32 = arith.constant 0 : i32
    %c0_i32_0 = arith.constant 0 : i32
    %c0_i32_1 = arith.constant 0 : i32
    return %c0_i32, %c0_i32_0 : i32, i32
  }
  func.func @transform_6(%arg0: i32) -> (i32, i32) {
    %c0_i32 = arith.constant 0 : i32
    %c0_i32_0 = arith.constant 0 : i32
    return %arg0, %c0_i32 : i32, i32
  }
}

</mosaic_0001>

<llo_original>
// kernel: tpu_custom_call.1
$region0: #{tpu_custom_call.1}
  #allocation0 [shape = 'u32[]', space=smem, size = 0x4, offset = 0x4, fixed_abs, tag = 'smem constant byte address 0x4 - core index']
  #allocation1 [shape = 'u32[144,128]{1,0:T(1,128)}', space=vmem, size = 0x12000, scoped, tag = 'internal scratch']
  %s0 = inlined_call_operand.hbm [shape: f32[12,512], index: 0, kind: input, shape index: {}]
  %s1 = inlined_call_operand.hbm [shape: bf16[512,512], index: 1, kind: input, shape index: {}]
  %s2 = inlined_call_operand.hbm [shape: bf16[512,512], index: 2, kind: input, shape index: {}]
  %s3 = inlined_call_operand.hbm [shape: bf16[512,512], index: 3, kind: input, shape index: {}]
  %s4 = inlined_call_operand.vmem [shape: f32[1,512], index: 4, kind: input, shape index: {}]
  %s5 = inlined_call_operand.vmem [shape: f32[1,512], index: 5, kind: input, shape index: {}]
  %s6 = inlined_call_operand.hbm [shape: f32[12,512], index: 6, kind: output, shape index: {}]
  %s7 = sld [smem:[#allocation0]]
  $region50: #{tpu_custom_call.1} parent=0
    _
  %s9 = ssub.s32 1, %s7
  %s10 = scalar_select 0, %s9, %s7
  $region1: #{tpu_custom_call.1} parent=0
    #allocation2 [shape = 'u8[32768]{0}', space=vmem, size = 0x8000, scoped, tag = 'input window, operand 0, single buffered']
    #allocation3 [shape = 's32[1]{0}', space=sflag, size = 0x4, scoped, tag = 'scoped memory for tpu_custom_call.1']
    #allocation4 [shape = 's32[1]{0}', space=sflag, size = 0x4, scoped, tag = 'scoped memory for tpu_custom_call.1']
    #allocation5 [shape = 'u8[524288]{0}', space=vmem, size = 0x80000, scoped, tag = 'input window, operand 1, single buffered']
    #allocation6 [shape = 's32[1]{0}', space=sflag, size = 0x4, scoped, tag = 'scoped memory for tpu_custom_call.1']
    #allocation7 [shape = 'u8[524288]{0}', space=vmem, size = 0x80000, scoped, tag = 'input window, operand 2, single buffered']
    #allocation8 [shape = 'u8[524288]{0}', space=vmem, size = 0x80000, scoped, tag = 'input window, operand 3, single buffered']
    #allocation9 [shape = 's32[1]{0}', space=sflag, size = 0x4, scoped, tag = 'scoped memory for tpu_custom_call.1']
    #allocation10 [shape = 'u8[32768]{0}', space=vmem, size = 0x8000, scoped, tag = 'output window, operand 0, single buffered']
    %11 = vsyncpa [#allocation3], 0
    %12 = vsyncpa [#allocation6], 0
    %13 = vsyncpa [#allocation9], 0
    %14 = vsyncpa [#allocation4], 0
    // Predicated region
    $region2: #{tpu_custom_call.1} parent=1 // pred_check
      _
    $region3: #{tpu_custom_call.1} parent=1 // pred_check_branch
      %16 = sbr.rel (0) target = $region5
    $region4: #{tpu_custom_call.1} parent=1 // pred_region
      %s18 = ssub.s32 1024, 1024
      %19 = vsyncadd [#allocation3], %s18
      %s20 = sshll.u32 [#allocation2], 4
      %s21 = int_to_ptr.vmem [resolvable:$true] %s20
      %26 = dma.hbm_to_vmem [thread:$0]  %s0, 1024, %s21, [#allocation3], 512, 512, 32
    $region5: #{tpu_custom_call.1} parent=1 // pred_fallthru
      _
    // Predicated region
    $region6: #{tpu_custom_call.1} parent=1 // pred_check
      _
    $region7: #{tpu_custom_call.1} parent=1 // pred_check_branch
      %28 = sbr.rel (0) target = $region9
    $region8: #{tpu_custom_call.1} parent=1 // pred_region
      %s30 = ssub.s32 16384, 16384
      %31 = vsyncadd [#allocation6], %s30
      %s32 = sshll.u32 [#allocation5], 4
      %s33 = int_to_ptr.vmem [resolvable:$true] %s32
      %38 = dma.hbm_to_vmem [thread:$0]  %s1, 16384, %s33, [#allocation6], 256, 256, 16
    $region9: #{tpu_custom_call.1} parent=1 // pred_fallthru
      _
    // Predicated region
    $region10: #{tpu_custom_call.1} parent=1 // pred_check
      _
    $region11: #{tpu_custom_call.1} parent=1 // pred_check_branch
      %40 = sbr.rel (0) target = $region13
    $region12: #{tpu_custom_call.1} parent=1 // pred_region
      %s42 = ssub.s32 16384, 16384
      %43 = vsyncadd [#allocation6], %s42
      %s44 = sshll.u32 [#allocation7], 4
      %s45 = int_to_ptr.vmem [resolvable:$true] %s44
      %50 = dma.hbm_to_vmem [thread:$0]  %s2, 16384, %s45, [#allocation6], 256, 256, 16
    $region13: #{tpu_custom_call.1} parent=1 // pred_fallthru
      _
    // Predicated region
    $region14: #{tpu_custom_call.1} parent=1 // pred_check
      _
    $region15: #{tpu_custom_call.1} parent=1 // pred_check_branch
      %52 = sbr.rel (0) target = $region17
    $region16: #{tpu_custom_call.1} parent=1 // pred_region
      %s54 = ssub.s32 16384, 16384
      %55 = vsyncadd [#allocation9], %s54
      %s56 = sshll.u32 [#allocation8], 4
      %s57 = int_to_ptr.vmem [resolvable:$true] %s56
      %62 = dma.hbm_to_vmem [thread:$0]  %s3, 16384, %s57, [#allocation9], 256, 256, 16
    $region17: #{tpu_custom_call.1} parent=1 // pred_fallthru
      _
    // Predicated region
    $region18: #{tpu_custom_call.1} parent=1 // pred_check
      _
    $region19: #{tpu_custom_call.1} parent=1 // pred_check_branch
      %64 = sbr.rel (0) target = $region21
    $region20: #{tpu_custom_call.1} parent=1 // pred_region
      _
    $region21: #{tpu_custom_call.1} parent=1 // pred_fallthru
      _
    // Predicated region
    $region22: #{tpu_custom_call.1} parent=1 // pred_check
      _
    $region23: #{tpu_custom_call.1} parent=1 // pred_check_branch
      %66 = sbr.rel (0) target = $region25
    $region24: #{tpu_custom_call.1} parent=1 // pred_region
      _
    $region25: #{tpu_custom_call.1} parent=1 // pred_fallthru
      _
    // Predicated region
    $region26: #{tpu_custom_call.1} parent=1 // pred_check
      _
    $region27: #{tpu_custom_call.1} parent=1 // pred_check_branch
      %68 = sbr.rel (0) target = $region29
    $region28: #{tpu_custom_call.1} parent=1 // pred_region
      %69 = dma.done [#allocation3], 1024
    $region29: #{tpu_custom_call.1} parent=1 // pred_fallthru
      _
    // Predicated region
    $region30: #{tpu_custom_call.1} parent=1 // pred_check
      _
    $region31: #{tpu_custom_call.1} parent=1 // pred_check_branch
      %71 = sbr.rel (0) target = $region33
    $region32: #{tpu_custom_call.1} parent=1 // pred_region
      %72 = dma.done [#allocation6], 16384
    $region33: #{tpu_custom_call.1} parent=1 // pred_fallthru
      _
    // Predicated region
    $region34: #{tpu_custom_call.1} parent=1 // pred_check
      _
    $region35: #{tpu_custom_call.1} parent=1 // pred_check_branch
      %74 = sbr.rel (0) target = $region37
    $region36: #{tpu_custom_call.1} parent=1 // pred_region
      %75 = dma.done [#allocation6], 16384
    $region37: #{tpu_custom_call.1} parent=1 // pred_fallthru
      _
    // Predicated region
    $region38: #{tpu_custom_call.1} parent=1 // pred_check
      _
    $region39: #{tpu_custom_call.1} parent=1 // pred_check_branch
      %77 = sbr.rel (0) target = $region41
    $region40: #{tpu_custom_call.1} parent=1 // pred_region
      %78 = dma.done [#allocation9], 16384
    $region41: #{tpu_custom_call.1} parent=1 // pred_fallthru
      _
    %v79 = vld [vmem:[#allocation2] sm:$0xff]
    %v80 = vld [vmem:[#allocation2 + $0x8] sm:$0xff]
    %v81 = vld [vmem:[#allocation2 + $0x10] sm:$0xff]
    %v82 = vld [vmem:[#allocation2 + $0x18] sm:$0xff]
    %v83 = vld [vmem:[#allocation2 + $0x20] sm:$0xff]
    %v84 = vld [vmem:[#allocation2 + $0x28] sm:$0xff]
    %v85 = vld [vmem:[#allocation2 + $0x30] sm:$0xff]
    %v86 = vld [vmem:[#allocation2 + $0x38] sm:$0xff]
    %v87 = vpack.c.bf16 %v83, %v79
    %v88 = vpack.c.bf16 %v84, %v80
    %v89 = vpack.c.bf16 %v85, %v81
    %v90 = vpack.c.bf16 %v86, %v82
    %v91 = vld [vmem:[#allocation5] sm:$0xff]
    %v92 = vld [vmem:[#allocation5 + $0x8] sm:$0xff]
    %v93 = vld [vmem:[#allocation5 + $0x10] sm:$0xff]
    %v94 = vld [vmem:[#allocation5 + $0x18] sm:$0xff]
    %v95 = vld [vmem:[#allocation5 + $0x20] sm:$0xff]
    %v96 = vld [vmem:[#allocation5 + $0x28] sm:$0xff]
    %v97 = vld [vmem:[#allocation5 + $0x30] sm:$0xff]
    %v98 = vld [vmem:[#allocation5 + $0x38] sm:$0xff]
    %v99 = vld [vmem:[#allocation5 + $0x40] sm:$0xff]
    %v100 = vld [vmem:[#allocation5 + $0x48] sm:$0xff]
    %v101 = vld [vmem:[#allocation5 + $0x50] sm:$0xff]
    %v102 = vld [vmem:[#allocation5 + $0x58] sm:$0xff]
    %v103 = vld [vmem:[#allocation5 + $0x60] sm:$0xff]
    %v104 = vld [vmem:[#allocation5 + $0x68] sm:$0xff]
    %v105 = vld [vmem:[#allocation5 + $0x70] sm:$0xff]
    %v106 = vld [vmem:[#allocation5 + $0x78] sm:$0xff]
    %v107 = vld [vmem:[#allocation5 + $0x80] sm:$0xff]
    %v108 = vld [vmem:[#allocation5 + $0x88] sm:$0xff]
    %v109 = vld [vmem:[#allocation5 + $0x90] sm:$0xff]
    %v110 = vld [vmem:[#allocation5 + $0x98] sm:$0xff]
    %v111 = vld [vmem:[#allocation5 + $0xa0] sm:$0xff]
    %v112 = vld [vmem:[#allocation5 + $0xa8] sm:$0xff]
    %v113 = vld [vmem:[#allocation5 + $0xb0] sm:$0xff]
    %v114 = vld [vmem:[#allocation5 + $0xb8] sm:$0xff]
    %v115 = vld [vmem:[#allocation5 + $0xc0] sm:$0xff]
    %v116 = vld [vmem:[#allocation5 + $0xc8] sm:$0xff]
    %v117 = vld [vmem:[#allocation5 + $0xd0] sm:$0xff]
    %v118 = vld [vmem:[#allocation5 + $0xd8] sm:$0xff]
    %v119 = vld [vmem:[#allocation5 + $0xe0] sm:$0xff]
    %v120 = vld [vmem:[#allocation5 + $0xe8] sm:$0xff]
    %v121 = vld [vmem:[#allocation5 + $0xf0] sm:$0xff]
    %v122 = vld [vmem:[#allocation5 + $0xf8] sm:$0xff]
    %v123 = vld [vmem:[#allocation5 + $0x100] sm:$0xff]
    %v124 = vld [vmem:[#allocation5 + $0x108] sm:$0xff]
    %v125 = vld [vmem:[#allocation5 + $0x110] sm:$0xff]
    %v126 = vld [vmem:[#allocation5 + $0x118] sm:$0xff]
    %v127 = vld [vmem:[#allocation5 + $0x120] sm:$0xff]
    %v128 = vld [vmem:[#allocation5 + $0x128] sm:$0xff]
    %v129 = vld [vmem:[#allocation5 + $0x130] sm:$0xff]
    %v130 = vld [vmem:[#allocation5 + $0x138] sm:$0xff]
    %v131 = vld [vmem:[#allocation5 + $0x140] sm:$0xff]
    %v132 = vld [vmem:[#allocation5 + $0x148] sm:$0xff]
    %v133 = vld [vmem:[#allocation5 + $0x150] sm:$0xff]
    %v134 = vld [vmem:[#allocation5 + $0x158] sm:$0xff]
    %v135 = vld [vmem:[#allocation5 + $0x160] sm:$0xff]
    %v136 = vld [vmem:[#allocation5 + $0x168] sm:$0xff]
    %v137 = vld [vmem:[#allocation5 + $0x170] sm:$0xff]
    %v138 = vld [vmem:[#allocation5 + $0x178] sm:$0xff]
    %v139 = vld [vmem:[#allocation5 + $0x180] sm:$0xff]
    %v140 = vld [vmem:[#allocation5 + $0x188] sm:$0xff]
    %v141 = vld [vmem:[#allocation5 + $0x190] sm:$0xff]
    %v142 = vld [vmem:[#allocation5 + $0x198] sm:$0xff]
    %v143 = vld [vmem:[#allocation5 + $0x1a0] sm:$0xff]
    %v144 = vld [vmem:[#allocation5 + $0x1a8] sm:$0xff]
    %v145 = vld [vmem:[#allocation5 + $0x1b0] sm:$0xff]
    %v146 = vld [vmem:[#allocation5 + $0x1b8] sm:$0xff]
    %v147 = vld [vmem:[#allocation5 + $0x1c0] sm:$0xff]
    %v148 = vld [vmem:[#allocation5 + $0x1c8] sm:$0xff]
    %v149 = vld [vmem:[#allocation5 + $0x1d0] sm:$0xff]
    %v150 = vld [vmem:[#allocation5 + $0x1d8] sm:$0xff]
    %v151 = vld [vmem:[#allocation5 + $0x1e0] sm:$0xff]
    %v152 = vld [vmem:[#allocation5 + $0x1e8] sm:$0xff]
    %v153 = vld [vmem:[#allocation5 + $0x1f0] sm:$0xff]
    %v154 = vld [vmem:[#allocation5 + $0x1f8] sm:$0xff]
    %v155 = vld [vmem:[#allocation5 + $0x200] sm:$0xff]
    %v156 = vld [vmem:[#allocation5 + $0x208] sm:$0xff]
    %v157 = vld [vmem:[#allocation5 + $0x210] sm:$0xff]
    %v158 = vld [vmem:[#allocation5 + $0x218] sm:$0xff]
    %v159 = vld [vmem:[#allocation5 + $0x220] sm:$0xff]
    %v160 = vld [vmem:[#allocation5 + $0x228] sm:$0xff]
    %v161 = vld [vmem:[#allocation5 + $0x230] sm:$0xff]
    %v162 = vld [vmem:[#allocation5 + $0x238] sm:$0xff]
    %v163 = vld [vmem:[#allocation5 + $0x240] sm:$0xff]
    %v164 = vld [vmem:[#allocation5 + $0x248] sm:$0xff]
    %v165 = vld [vmem:[#allocation5 + $0x250] sm:$0xff]
    %v166 = vld [vmem:[#allocation5 + $0x258] sm:$0xff]
    %v167 = vld [vmem:[#allocation5 + $0x260] sm:$0xff]
    %v168 = vld [vmem:[#allocation5 + $0x268] sm:$0xff]
    %v169 = vld [vmem:[#allocation5 + $0x270] sm:$0xff]
    %v170 = vld [vmem:[#allocation5 + $0x278] sm:$0xff]
    %v171 = vld [vmem:[#allocation5 + $0x280] sm:$0xff]
    %v172 = vld [vmem:[#allocation5 + $0x288] sm:$0xff]
    %v173 = vld [vmem:[#allocation5 + $0x290] sm:$0xff]
    %v174 = vld [vmem:[#allocation5 + $0x298] sm:$0xff]
    %v175 = vld [vmem:[#allocation5 + $0x2a0] sm:$0xff]
    %v176 = vld [vmem:[#allocation5 + $0x2a8] sm:$0xff]
    %v177 = vld [vmem:[#allocation5 + $0x2b0] sm:$0xff]
    %v178 = vld [vmem:[#allocation5 + $0x2b8] sm:$0xff]
    %v179 = vld [vmem:[#allocation5 + $0x2c0] sm:$0xff]
    %v180 = vld [vmem:[#allocation5 + $0x2c8] sm:$0xff]
    %v181 = vld [vmem:[#allocation5 + $0x2d0] sm:$0xff]
    %v182 = vld [vmem:[#allocation5 + $0x2d8] sm:$0xff]
    %v183 = vld [vmem:[#allocation5 + $0x2e0] sm:$0xff]
    %v184 = vld [vmem:[#allocation5 + $0x2e8] sm:$0xff]
    %v185 = vld [vmem:[#allocation5 + $0x2f0] sm:$0xff]
    %v186 = vld [vmem:[#allocation5 + $0x2f8] sm:$0xff]
    %v187 = vld [vmem:[#allocation5 + $0x300] sm:$0xff]
    %v188 = vld [vmem:[#allocation5 + $0x308] sm:$0xff]
    %v189 = vld [vmem:[#allocation5 + $0x310] sm:$0xff]
    %v190 = vld [vmem:[#allocation5 + $0x318] sm:$0xff]
    %v191 = vld [vmem:[#allocation5 + $0x320] sm:$0xff]
    %v192 = vld [vmem:[#allocation5 + $0x328] sm:$0xff]
    %v193 = vld [vmem:[#allocation5 + $0x330] sm:$0xff]
    %v194 = vld [vmem:[#allocation5 + $0x338] sm:$0xff]
    %v195 = vld [vmem:[#allocation5 + $0x340] sm:$0xff]
    %v196 = vld [vmem:[#allocation5 + $0x348] sm:$0xff]
    %v197 = vld [vmem:[#allocation5 + $0x350] sm:$0xff]
    %v198 = vld [vmem:[#allocation5 + $0x358] sm:$0xff]
    %v199 = vld [vmem:[#allocation5 + $0x360] sm:$0xff]
    %v200 = vld [vmem:[#allocation5 + $0x368] sm:$0xff]
    %v201 = vld [vmem:[#allocation5 + $0x370] sm:$0xff]
    %v202 = vld [vmem:[#allocation5 + $0x378] sm:$0xff]
    %v203 = vld [vmem:[#allocation5 + $0x380] sm:$0xff]
    %v204 = vld [vmem:[#allocation5 + $0x388] sm:$0xff]
    %v205 = vld [vmem:[#allocation5 + $0x390] sm:$0xff]
    %v206 = vld [vmem:[#allocation5 + $0x398] sm:$0xff]
    %v207 = vld [vmem:[#allocation5 + $0x3a0] sm:$0xff]
    %v208 = vld [vmem:[#allocation5 + $0x3a8] sm:$0xff]
    %v209 = vld [vmem:[#allocation5 + $0x3b0] sm:$0xff]
    %v210 = vld [vmem:[#allocation5 + $0x3b8] sm:$0xff]
    %v211 = vld [vmem:[#allocation5 + $0x3c0] sm:$0xff]
    %v212 = vld [vmem:[#allocation5 + $0x3c8] sm:$0xff]
    %v213 = vld [vmem:[#allocation5 + $0x3d0] sm:$0xff]
    %v214 = vld [vmem:[#allocation5 + $0x3d8] sm:$0xff]
    %v215 = vld [vmem:[#allocation5 + $0x3e0] sm:$0xff]
    %v216 = vld [vmem:[#allocation5 + $0x3e8] sm:$0xff]
    %v217 = vld [vmem:[#allocation5 + $0x3f0] sm:$0xff]
    %v218 = vld [vmem:[#allocation5 + $0x3f8] sm:$0xff]
    %v219 = vld [vmem:[#allocation7] sm:$0xff]
    %v220 = vld [vmem:[#allocation7 + $0x8] sm:$0xff]
    %v221 = vld [vmem:[#allocation7 + $0x10] sm:$0xff]
    %v222 = vld [vmem:[#allocation7 + $0x18] sm:$0xff]
    %v223 = vld [vmem:[#allocation7 + $0x20] sm:$0xff]
    %v224 = vld [vmem:[#allocation7 + $0x28] sm:$0xff]
    %v225 = vld [vmem:[#allocation7 + $0x30] sm:$0xff]
    %v226 = vld [vmem:[#allocation7 + $0x38] sm:$0xff]
    %v227 = vld [vmem:[#allocation7 + $0x40] sm:$0xff]
    %v228 = vld [vmem:[#allocation7 + $0x48] sm:$0xff]
    %v229 = vld [vmem:[#allocation7 + $0x50] sm:$0xff]
    %v230 = vld [vmem:[#allocation7 + $0x58] sm:$0xff]
    %v231 = vld [vmem:[#allocation7 + $0x60] sm:$0xff]
    %v232 = vld [vmem:[#allocation7 + $0x68] sm:$0xff]
    %v233 = vld [vmem:[#allocation7 + $0x70] sm:$0xff]
    %v234 = vld [vmem:[#allocation7 + $0x78] sm:$0xff]
    %v235 = vld [vmem:[#allocation7 + $0x80] sm:$0xff]
    %v236 = vld [vmem:[#allocation7 + $0x88] sm:$0xff]
    %v237 = vld [vmem:[#allocation7 + $0x90] sm:$0xff]
    %v238 = vld [vmem:[#allocation7 + $0x98] sm:$0xff]
    %v239 = vld [vmem:[#allocation7 + $0xa0] sm:$0xff]
    %v240 = vld [vmem:[#allocation7 + $0xa8] sm:$0xff]
    %v241 = vld [vmem:[#allocation7 + $0xb0] sm:$0xff]
    %v242 = vld [vmem:[#allocation7 + $0xb8] sm:$0xff]
    %v243 = vld [vmem:[#allocation7 + $0xc0] sm:$0xff]
    %v244 = vld [vmem:[#allocation7 + $0xc8] sm:$0xff]
    %v245 = vld [vmem:[#allocation7 + $0xd0] sm:$0xff]
    %v246 = vld [vmem:[#allocation7 + $0xd8] sm:$0xff]
    %v247 = vld [vmem:[#allocation7 + $0xe0] sm:$0xff]
    %v248 = vld [vmem:[#allocation7 + $0xe8] sm:$0xff]
    %v249 = vld [vmem:[#allocation7 + $0xf0] sm:$0xff]
    %v250 = vld [vmem:[#allocation7 + $0xf8] sm:$0xff]
    %v251 = vld [vmem:[#allocation7 + $0x100] sm:$0xff]
    %v252 = vld [vmem:[#allocation7 + $0x108] sm:$0xff]
    %v253 = vld [vmem:[#allocation7 + $0x110] sm:$0xff]
    %v254 = vld [vmem:[#allocation7 + $0x118] sm:$0xff]
    %v255 = vld [vmem:[#allocation7 + $0x120] sm:$0xff]
    %v256 = vld [vmem:[#allocation7 + $0x128] sm:$0xff]
    %v257 = vld [vmem:[#allocation7 + $0x130] sm:$0xff]
    %v258 = vld [vmem:[#allocation7 + $0x138] sm:$0xff]
    %v259 = vld [vmem:[#allocation7 + $0x140] sm:$0xff]
    %v260 = vld [vmem:[#allocation7 + $0x148] sm:$0xff]
    %v261 = vld [vmem:[#allocation7 + $0x150] sm:$0xff]
    %v262 = vld [vmem:[#allocation7 + $0x158] sm:$0xff]
    %v263 = vld [vmem:[#allocation7 + $0x160] sm:$0xff]
    %v264 = vld [vmem:[#allocation7 + $0x168] sm:$0xff]
    %v265 = vld [vmem:[#allocation7 + $0x170] sm:$0xff]
    %v266 = vld [vmem:[#allocation7 + $0x178] sm:$0xff]
    %v267 = vld [vmem:[#allocation7 + $0x180] sm:$0xff]
    %v268 = vld [vmem:[#allocation7 + $0x188] sm:$0xff]
    %v269 = vld [vmem:[#allocation7 + $0x190] sm:$0xff]
    %v270 = vld [vmem:[#allocation7 + $0x198] sm:$0xff]
    %v271 = vld [vmem:[#allocation7 + $0x1a0] sm:$0xff]
    %v272 = vld [vmem:[#allocation7 + $0x1a8] sm:$0xff]
    %v273 = vld [vmem:[#allocation7 + $0x1b0] sm:$0xff]
    %v274 = vld [vmem:[#allocation7 + $0x1b8] sm:$0xff]
    %v275 = vld [vmem:[#allocation7 + $0x1c0] sm:$0xff]
    %v276 = vld [vmem:[#allocation7 + $0x1c8] sm:$0xff]
    %v277 = vld [vmem:[#allocation7 + $0x1d0] sm:$0xff]
    %v278 = vld [vmem:[#allocation7 + $0x1d8] sm:$0xff]
    %v279 = vld [vmem:[#allocation7 + $0x1e0] sm:$0xff]
    %v280 = vld [vmem:[#allocation7 + $0x1e8] sm:$0xff]
    %v281 = vld [vmem:[#allocation7 + $0x1f0] sm:$0xff]
    %v282 = vld [vmem:[#allocation7 + $0x1f8] sm:$0xff]
    %v283 = vld [vmem:[#allocation7 + $0x200] sm:$0xff]
    %v284 = vld [vmem:[#allocation7 + $0x208] sm:$0xff]
    %v285 = vld [vmem:[#allocation7 + $0x210] sm:$0xff]
    %v286 = vld [vmem:[#allocation7 + $0x218] sm:$0xff]
    %v287 = vld [vmem:[#allocation7 + $0x220] sm:$0xff]
    %v288 = vld [vmem:[#allocation7 + $0x228] sm:$0xff]
    %v289 = vld [vmem:[#allocation7 + $0x230] sm:$0xff]
    %v290 = vld [vmem:[#allocation7 + $0x238] sm:$0xff]
    %v291 = vld [vmem:[#allocation7 + $0x240] sm:$0xff]
    %v292 = vld [vmem:[#allocation7 + $0x248] sm:$0xff]
    %v293 = vld [vmem:[#allocation7 + $0x250] sm:$0xff]
    %v294 = vld [vmem:[#allocation7 + $0x258] sm:$0xff]
    %v295 = vld [vmem:[#allocation7 + $0x260] sm:$0xff]
    %v296 = vld [vmem:[#allocation7 + $0x268] sm:$0xff]
    %v297 = vld [vmem:[#allocation7 + $0x270] sm:$0xff]
    %v298 = vld [vmem:[#allocation7 + $0x278] sm:$0xff]
    %v299 = vld [vmem:[#allocation7 + $0x280] sm:$0xff]
    %v300 = vld [vmem:[#allocation7 + $0x288] sm:$0xff]
    %v301 = vld [vmem:[#allocation7 + $0x290] sm:$0xff]
    %v302 = vld [vmem:[#allocation7 + $0x298] sm:$0xff]
    %v303 = vld [vmem:[#allocation7 + $0x2a0] sm:$0xff]
    %v304 = vld [vmem:[#allocation7 + $0x2a8] sm:$0xff]
    %v305 = vld [vmem:[#allocation7 + $0x2b0] sm:$0xff]
    %v306 = vld [vmem:[#allocation7 + $0x2b8] sm:$0xff]
    %v307 = vld [vmem:[#allocation7 + $0x2c0] sm:$0xff]
    %v308 = vld [vmem:[#allocation7 + $0x2c8] sm:$0xff]
    %v309 = vld [vmem:[#allocation7 + $0x2d0] sm:$0xff]
    %v310 = vld [vmem:[#allocation7 + $0x2d8] sm:$0xff]
    %v311 = vld [vmem:[#allocation7 + $0x2e0] sm:$0xff]
    %v312 = vld [vmem:[#allocation7 + $0x2e8] sm:$0xff]
    %v313 = vld [vmem:[#allocation7 + $0x2f0] sm:$0xff]
    %v314 = vld [vmem:[#allocation7 + $0x2f8] sm:$0xff]
    %v315 = vld [vmem:[#allocation7 + $0x300] sm:$0xff]
    %v316 = vld [vmem:[#allocation7 + $0x308] sm:$0xff]
    %v317 = vld [vmem:[#allocation7 + $0x310] sm:$0xff]
    %v318 = vld [vmem:[#allocation7 + $0x318] sm:$0xff]
    %v319 = vld [vmem:[#allocation7 + $0x320] sm:$0xff]
    %v320 = vld [vmem:[#allocation7 + $0x328] sm:$0xff]
    %v321 = vld [vmem:[#allocation7 + $0x330] sm:$0xff]
    %v322 = vld [vmem:[#allocation7 + $0x338] sm:$0xff]
    %v323 = vld [vmem:[#allocation7 + $0x340] sm:$0xff]
    %v324 = vld [vmem:[#allocation7 + $0x348] sm:$0xff]
    %v325 = vld [vmem:[#allocation7 + $0x350] sm:$0xff]
    %v326 = vld [vmem:[#allocation7 + $0x358] sm:$0xff]
    %v327 = vld [vmem:[#allocation7 + $0x360] sm:$0xff]
    %v328 = vld [vmem:[#allocation7 + $0x368] sm:$0xff]
    %v329 = vld [vmem:[#allocation7 + $0x370] sm:$0xff]
    %v330 = vld [vmem:[#allocation7 + $0x378] sm:$0xff]
    %v331 = vld [vmem:[#allocation7 + $0x380] sm:$0xff]
    %v332 = vld [vmem:[#allocation7 + $0x388] sm:$0xff]
    %v333 = vld [vmem:[#allocation7 + $0x390] sm:$0xff]
    %v334 = vld [vmem:[#allocation7 + $0x398] sm:$0xff]
    %v335 = vld [vmem:[#allocation7 + $0x3a0] sm:$0xff]
    %v336 = vld [vmem:[#allocation7 + $0x3a8] sm:$0xff]
    %v337 = vld [vmem:[#allocation7 + $0x3b0] sm:$0xff]
    %v338 = vld [vmem:[#allocation7 + $0x3b8] sm:$0xff]
    %v339 = vld [vmem:[#allocation7 + $0x3c0] sm:$0xff]
    %v340 = vld [vmem:[#allocation7 + $0x3c8] sm:$0xff]
    %v341 = vld [vmem:[#allocation7 + $0x3d0] sm:$0xff]
    %v342 = vld [vmem:[#allocation7 + $0x3d8] sm:$0xff]
    %v343 = vld [vmem:[#allocation7 + $0x3e0] sm:$0xff]
    %v344 = vld [vmem:[#allocation7 + $0x3e8] sm:$0xff]
    %v345 = vld [vmem:[#allocation7 + $0x3f0] sm:$0xff]
    %v346 = vld [vmem:[#allocation7 + $0x3f8] sm:$0xff]
    %v347 = vld [vmem:[#allocation8] sm:$0xff]
    %v348 = vld [vmem:[#allocation8 + $0x8] sm:$0xff]
    %v349 = vld [vmem:[#allocation8 + $0x10] sm:$0xff]
    %v350 = vld [vmem:[#allocation8 + $0x18] sm:$0xff]
    %v351 = vld [vmem:[#allocation8 + $0x20] sm:$0xff]
    %v352 = vld [vmem:[#allocation8 + $0x28] sm:$0xff]
    %v353 = vld [vmem:[#allocation8 + $0x30] sm:$0xff]
    %v354 = vld [vmem:[#allocation8 + $0x38] sm:$0xff]
    %v355 = vld [vmem:[#allocation8 + $0x40] sm:$0xff]
    %v356 = vld [vmem:[#allocation8 + $0x48] sm:$0xff]
    %v357 = vld [vmem:[#allocation8 + $0x50] sm:$0xff]
    %v358 = vld [vmem:[#allocation8 + $0x58] sm:$0xff]
    %v359 = vld [vmem:[#allocation8 + $0x60] sm:$0xff]
    %v360 = vld [vmem:[#allocation8 + $0x68] sm:$0xff]
    %v361 = vld [vmem:[#allocation8 + $0x70] sm:$0xff]
    %v362 = vld [vmem:[#allocation8 + $0x78] sm:$0xff]
    %v363 = vld [vmem:[#allocation8 + $0x80] sm:$0xff]
    %v364 = vld [vmem:[#allocation8 + $0x88] sm:$0xff]
    %v365 = vld [vmem:[#allocation8 + $0x90] sm:$0xff]
    %v366 = vld [vmem:[#allocation8 + $0x98] sm:$0xff]
    %v367 = vld [vmem:[#allocation8 + $0xa0] sm:$0xff]
    %v368 = vld [vmem:[#allocation8 + $0xa8] sm:$0xff]
    %v369 = vld [vmem:[#allocation8 + $0xb0] sm:$0xff]
    %v370 = vld [vmem:[#allocation8 + $0xb8] sm:$0xff]
    %v371 = vld [vmem:[#allocation8 + $0xc0] sm:$0xff]
    %v372 = vld [vmem:[#allocation8 + $0xc8] sm:$0xff]
    %v373 = vld [vmem:[#allocation8 + $0xd0] sm:$0xff]
    %v374 = vld [vmem:[#allocation8 + $0xd8] sm:$0xff]
    %v375 = vld [vmem:[#allocation8 + $0xe0] sm:$0xff]
    %v376 = vld [vmem:[#allocation8 + $0xe8] sm:$0xff]
    %v377 = vld [vmem:[#allocation8 + $0xf0] sm:$0xff]
    %v378 = vld [vmem:[#allocation8 + $0xf8] sm:$0xff]
    %v379 = vld [vmem:[#allocation8 + $0x100] sm:$0xff]
    %v380 = vld [vmem:[#allocation8 + $0x108] sm:$0xff]
    %v381 = vld [vmem:[#allocation8 + $0x110] sm:$0xff]
    %v382 = vld [vmem:[#allocation8 + $0x118] sm:$0xff]
    %v383 = vld [vmem:[#allocation8 + $0x120] sm:$0xff]
    %v384 = vld [vmem:[#allocation8 + $0x128] sm:$0xff]
    %v385 = vld [vmem:[#allocation8 + $0x130] sm:$0xff]
    %v386 = vld [vmem:[#allocation8 + $0x138] sm:$0xff]
    %v387 = vld [vmem:[#allocation8 + $0x140] sm:$0xff]
    %v388 = vld [vmem:[#allocation8 + $0x148] sm:$0xff]
    %v389 = vld [vmem:[#allocation8 + $0x150] sm:$0xff]
    %v390 = vld [vmem:[#allocation8 + $0x158] sm:$0xff]
    %v391 = vld [vmem:[#allocation8 + $0x160] sm:$0xff]
    %v392 = vld [vmem:[#allocation8 + $0x168] sm:$0xff]
    %v393 = vld [vmem:[#allocation8 + $0x170] sm:$0xff]
    %v394 = vld [vmem:[#allocation8 + $0x178] sm:$0xff]
    %v395 = vld [vmem:[#allocation8 + $0x180] sm:$0xff]
    %v396 = vld [vmem:[#allocation8 + $0x188] sm:$0xff]
    %v397 = vld [vmem:[#allocation8 + $0x190] sm:$0xff]
    %v398 = vld [vmem:[#allocation8 + $0x198] sm:$0xff]
    %v399 = vld [vmem:[#allocation8 + $0x1a0] sm:$0xff]
    %v400 = vld [vmem:[#allocation8 + $0x1a8] sm:$0xff]
    %v401 = vld [vmem:[#allocation8 + $0x1b0] sm:$0xff]
    %v402 = vld [vmem:[#allocation8 + $0x1b8] sm:$0xff]
    %v403 = vld [vmem:[#allocation8 + $0x1c0] sm:$0xff]
    %v404 = vld [vmem:[#allocation8 + $0x1c8] sm:$0xff]
    %v405 = vld [vmem:[#allocation8 + $0x1d0] sm:$0xff]
    %v406 = vld [vmem:[#allocation8 + $0x1d8] sm:$0xff]
    %v407 = vld [vmem:[#allocation8 + $0x1e0] sm:$0xff]
    %v408 = vld [vmem:[#allocation8 + $0x1e8] sm:$0xff]
    %v409 = vld [vmem:[#allocation8 + $0x1f0] sm:$0xff]
    %v410 = vld [vmem:[#allocation8 + $0x1f8] sm:$0xff]
    %v411 = vld [vmem:[#allocation8 + $0x200] sm:$0xff]
    %v412 = vld [vmem:[#allocation8 + $0x208] sm:$0xff]
    %v413 = vld [vmem:[#allocation8 + $0x210] sm:$0xff]
    %v414 = vld [vmem:[#allocation8 + $0x218] sm:$0xff]
    %v415 = vld [vmem:[#allocation8 + $0x220] sm:$0xff]
    %v416 = vld [vmem:[#allocation8 + $0x228] sm:$0xff]
    %v417 = vld [vmem:[#allocation8 + $0x230] sm:$0xff]
    %v418 = vld [vmem:[#allocation8 + $0x238] sm:$0xff]
    %v419 = vld [vmem:[#allocation8 + $0x240] sm:$0xff]
    %v420 = vld [vmem:[#allocation8 + $0x248] sm:$0xff]
    %v421 = vld [vmem:[#allocation8 + $0x250] sm:$0xff]
    %v422 = vld [vmem:[#allocation8 + $0x258] sm:$0xff]
    %v423 = vld [vmem:[#allocation8 + $0x260] sm:$0xff]
    %v424 = vld [vmem:[#allocation8 + $0x268] sm:$0xff]
    %v425 = vld [vmem:[#allocation8 + $0x270] sm:$0xff]
    %v426 = vld [vmem:[#allocation8 + $0x278] sm:$0xff]
    %v427 = vld [vmem:[#allocation8 + $0x280] sm:$0xff]
    %v428 = vld [vmem:[#allocation8 + $0x288] sm:$0xff]
    %v429 = vld [vmem:[#allocation8 + $0x290] sm:$0xff]
    %v430 = vld [vmem:[#allocation8 + $0x298] sm:$0xff]
    %v431 = vld [vmem:[#allocation8 + $0x2a0] sm:$0xff]
    %v432 = vld [vmem:[#allocation8 + $0x2a8] sm:$0xff]
    %v433 = vld [vmem:[#allocation8 + $0x2b0] sm:$0xff]
    %v434 = vld [vmem:[#allocation8 + $0x2b8] sm:$0xff]
    %v435 = vld [vmem:[#allocation8 + $0x2c0] sm:$0xff]
    %v436 = vld [vmem:[#allocation8 + $0x2c8] sm:$0xff]
    %v437 = vld [vmem:[#allocation8 + $0x2d0] sm:$0xff]
    %v438 = vld [vmem:[#allocation8 + $0x2d8] sm:$0xff]
    %v439 = vld [vmem:[#allocation8 + $0x2e0] sm:$0xff]
    %v440 = vld [vmem:[#allocation8 + $0x2e8] sm:$0xff]
    %v441 = vld [vmem:[#allocation8 + $0x2f0] sm:$0xff]
    %v442 = vld [vmem:[#allocation8 + $0x2f8] sm:$0xff]
    %v443 = vld [vmem:[#allocation8 + $0x300] sm:$0xff]
    %v444 = vld [vmem:[#allocation8 + $0x308] sm:$0xff]
    %v445 = vld [vmem:[#allocation8 + $0x310] sm:$0xff]
    %v446 = vld [vmem:[#allocation8 + $0x318] sm:$0xff]
    %v447 = vld [vmem:[#allocation8 + $0x320] sm:$0xff]
    %v448 = vld [vmem:[#allocation8 + $0x328] sm:$0xff]
    %v449 = vld [vmem:[#allocation8 + $0x330] sm:$0xff]
    %v450 = vld [vmem:[#allocation8 + $0x338] sm:$0xff]
    %v451 = vld [vmem:[#allocation8 + $0x340] sm:$0xff]
    %v452 = vld [vmem:[#allocation8 + $0x348] sm:$0xff]
    %v453 = vld [vmem:[#allocation8 + $0x350] sm:$0xff]
    %v454 = vld [vmem:[#allocation8 + $0x358] sm:$0xff]
    %v455 = vld [vmem:[#allocation8 + $0x360] sm:$0xff]
    %v456 = vld [vmem:[#allocation8 + $0x368] sm:$0xff]
    %v457 = vld [vmem:[#allocation8 + $0x370] sm:$0xff]
    %v458 = vld [vmem:[#allocation8 + $0x378] sm:$0xff]
    %v459 = vld [vmem:[#allocation8 + $0x380] sm:$0xff]
    %v460 = vld [vmem:[#allocation8 + $0x388] sm:$0xff]
    %v461 = vld [vmem:[#allocation8 + $0x390] sm:$0xff]
    %v462 = vld [vmem:[#allocation8 + $0x398] sm:$0xff]
    %v463 = vld [vmem:[#allocation8 + $0x3a0] sm:$0xff]
    %v464 = vld [vmem:[#allocation8 + $0x3a8] sm:$0xff]
    %v465 = vld [vmem:[#allocation8 + $0x3b0] sm:$0xff]
    %v466 = vld [vmem:[#allocation8 + $0x3b8] sm:$0xff]
    %v467 = vld [vmem:[#allocation8 + $0x3c0] sm:$0xff]
    %v468 = vld [vmem:[#allocation8 + $0x3c8] sm:$0xff]
    %v469 = vld [vmem:[#allocation8 + $0x3d0] sm:$0xff]
    %v470 = vld [vmem:[#allocation8 + $0x3d8] sm:$0xff]
    %v471 = vld [vmem:[#allocation8 + $0x3e0] sm:$0xff]
    %v472 = vld [vmem:[#allocation8 + $0x3e8] sm:$0xff]
    %v473 = vld [vmem:[#allocation8 + $0x3f0] sm:$0xff]
    %v474 = vld [vmem:[#allocation8 + $0x3f8] sm:$0xff]
    %v475 = vld [vmem:[%s4] sm:$0xf]
    %v476 = vld [vmem:[%s5] sm:$0xf]
    %v605 = vunpack.c.l.b16 %v91
    %v606 = vunpack.c.h.b16 %v91
    %v607 = vunpack.c.l.b16 %v92
    %v608 = vunpack.c.h.b16 %v92
    %v609 = vunpack.c.l.b16 %v93
    %v610 = vunpack.c.h.b16 %v93
    %v611 = vunpack.c.l.b16 %v94
    %v612 = vunpack.c.h.b16 %v94
    %v613 = vunpack.c.l.b16 %v95
    %v614 = vunpack.c.h.b16 %v95
    %v615 = vunpack.c.l.b16 %v96
    %v616 = vunpack.c.h.b16 %v96
    %v617 = vunpack.c.l.b16 %v97
    %v618 = vunpack.c.h.b16 %v97
    %v619 = vunpack.c.l.b16 %v98
    %v620 = vunpack.c.h.b16 %v98
    %v621 = vunpack.c.l.b16 %v99
    %v622 = vunpack.c.h.b16 %v99
    %v623 = vunpack.c.l.b16 %v100
    %v624 = vunpack.c.h.b16 %v100
    %v625 = vunpack.c.l.b16 %v101
    %v626 = vunpack.c.h.b16 %v101
    %v627 = vunpack.c.l.b16 %v102
    %v628 = vunpack.c.h.b16 %v102
    %v629 = vunpack.c.l.b16 %v103
    %v630 = vunpack.c.h.b16 %v103
    %v631 = vunpack.c.l.b16 %v104
    %v632 = vunpack.c.h.b16 %v104
    %v633 = vunpack.c.l.b16 %v105
    %v634 = vunpack.c.h.b16 %v105
    %v635 = vunpack.c.l.b16 %v106
    %v636 = vunpack.c.h.b16 %v106
    %v637 = vunpack.c.l.b16 %v107
    %v638 = vunpack.c.h.b16 %v107
    %v639 = vunpack.c.l.b16 %v108
    %v640 = vunpack.c.h.b16 %v108
    %v641 = vunpack.c.l.b16 %v109
    %v642 = vunpack.c.h.b16 %v109
    %v643 = vunpack.c.l.b16 %v110
    %v644 = vunpack.c.h.b16 %v110
    %v645 = vunpack.c.l.b16 %v111
    %v646 = vunpack.c.h.b16 %v111
    %v647 = vunpack.c.l.b16 %v112
    %v648 = vunpack.c.h.b16 %v112
    %v649 = vunpack.c.l.b16 %v113
    %v650 = vunpack.c.h.b16 %v113
    %v651 = vunpack.c.l.b16 %v114
    %v652 = vunpack.c.h.b16 %v114
    %v653 = vunpack.c.l.b16 %v115
    %v654 = vunpack.c.h.b16 %v115
    %v655 = vunpack.c.l.b16 %v116
    %v656 = vunpack.c.h.b16 %v116
    %v657 = vunpack.c.l.b16 %v117
    %v658 = vunpack.c.h.b16 %v117
    %v659 = vunpack.c.l.b16 %v118
    %v660 = vunpack.c.h.b16 %v118
    %v661 = vunpack.c.l.b16 %v119
    %v662 = vunpack.c.h.b16 %v119
    %v663 = vunpack.c.l.b16 %v120
    %v664 = vunpack.c.h.b16 %v120
    %v665 = vunpack.c.l.b16 %v121
    %v666 = vunpack.c.h.b16 %v121
    %v667 = vunpack.c.l.b16 %v122
    %v668 = vunpack.c.h.b16 %v122
    %v669 = vunpack.c.l.b16 %v123
    %v670 = vunpack.c.h.b16 %v123
    %v671 = vunpack.c.l.b16 %v124
    %v672 = vunpack.c.h.b16 %v124
    %v673 = vunpack.c.l.b16 %v125
    %v674 = vunpack.c.h.b16 %v125
    %v675 = vunpack.c.l.b16 %v126
    %v676 = vunpack.c.h.b16 %v126
    %v677 = vunpack.c.l.b16 %v127
    %v678 = vunpack.c.h.b16 %v127
    %v679 = vunpack.c.l.b16 %v128
    %v680 = vunpack.c.h.b16 %v128
    %v681 = vunpack.c.l.b16 %v129
    %v682 = vunpack.c.h.b16 %v129
    %v683 = vunpack.c.l.b16 %v130
    %v684 = vunpack.c.h.b16 %v130
    %v685 = vunpack.c.l.b16 %v131
    %v686 = vunpack.c.h.b16 %v131
    %v687 = vunpack.c.l.b16 %v132
    %v688 = vunpack.c.h.b16 %v132
    %v689 = vunpack.c.l.b16 %v133
    %v690 = vunpack.c.h.b16 %v133
    %v691 = vunpack.c.l.b16 %v134
    %v692 = vunpack.c.h.b16 %v134
    %v693 = vunpack.c.l.b16 %v135
    %v694 = vunpack.c.h.b16 %v135
    %v695 = vunpack.c.l.b16 %v136
    %v696 = vunpack.c.h.b16 %v136
    %v697 = vunpack.c.l.b16 %v137
    %v698 = vunpack.c.h.b16 %v137
    %v699 = vunpack.c.l.b16 %v138
    %v700 = vunpack.c.h.b16 %v138
    %v701 = vunpack.c.l.b16 %v139
    %v702 = vunpack.c.h.b16 %v139
    %v703 = vunpack.c.l.b16 %v140
    %v704 = vunpack.c.h.b16 %v140
    %v705 = vunpack.c.l.b16 %v141
    %v706 = vunpack.c.h.b16 %v141
    %v707 = vunpack.c.l.b16 %v142
    %v708 = vunpack.c.h.b16 %v142
    %v709 = vunpack.c.l.b16 %v143
    %v710 = vunpack.c.h.b16 %v143
    %v711 = vunpack.c.l.b16 %v144
    %v712 = vunpack.c.h.b16 %v144
    %v713 = vunpack.c.l.b16 %v145
    %v714 = vunpack.c.h.b16 %v145
    %v715 = vunpack.c.l.b16 %v146
    %v716 = vunpack.c.h.b16 %v146
    %v717 = vunpack.c.l.b16 %v147
    %v718 = vunpack.c.h.b16 %v147
    %v719 = vunpack.c.l.b16 %v148
    %v720 = vunpack.c.h.b16 %v148
    %v721 = vunpack.c.l.b16 %v149
    %v722 = vunpack.c.h.b16 %v149
    %v723 = vunpack.c.l.b16 %v150
    %v724 = vunpack.c.h.b16 %v150
    %v725 = vunpack.c.l.b16 %v151
    %v726 = vunpack.c.h.b16 %v151
    %v727 = vunpack.c.l.b16 %v152
    %v728 = vunpack.c.h.b16 %v152
    %v729 = vunpack.c.l.b16 %v153
    %v730 = vunpack.c.h.b16 %v153
    %v731 = vunpack.c.l.b16 %v154
    %v732 = vunpack.c.h.b16 %v154
    %v733 = vunpack.c.l.b16 %v155
    %v734 = vunpack.c.h.b16 %v155
    %v735 = vunpack.c.l.b16 %v156
    %v736 = vunpack.c.h.b16 %v156
    %v737 = vunpack.c.l.b16 %v157
    %v738 = vunpack.c.h.b16 %v157
    %v739 = vunpack.c.l.b16 %v158
    %v740 = vunpack.c.h.b16 %v158
    %v741 = vunpack.c.l.b16 %v159
    %v742 = vunpack.c.h.b16 %v159
    %v743 = vunpack.c.l.b16 %v160
    %v744 = vunpack.c.h.b16 %v160
    %v745 = vunpack.c.l.b16 %v161
    %v746 = vunpack.c.h.b16 %v161
    %v747 = vunpack.c.l.b16 %v162
    %v748 = vunpack.c.h.b16 %v162
    %v749 = vunpack.c.l.b16 %v163
    %v750 = vunpack.c.h.b16 %v163
    %v751 = vunpack.c.l.b16 %v164
    %v752 = vunpack.c.h.b16 %v164
    %v753 = vunpack.c.l.b16 %v165
    %v754 = vunpack.c.h.b16 %v165
    %v755 = vunpack.c.l.b16 %v166
    %v756 = vunpack.c.h.b16 %v166
    %v757 = vunpack.c.l.b16 %v167
    %v758 = vunpack.c.h.b16 %v167
    %v759 = vunpack.c.l.b16 %v168
    %v760 = vunpack.c.h.b16 %v168
    %v761 = vunpack.c.l.b16 %v169
    %v762 = vunpack.c.h.b16 %v169
    %v763 = vunpack.c.l.b16 %v170
    %v764 = vunpack.c.h.b16 %v170
    %v765 = vunpack.c.l.b16 %v171
    %v766 = vunpack.c.h.b16 %v171
    %v767 = vunpack.c.l.b16 %v172
    %v768 = vunpack.c.h.b16 %v172
    %v769 = vunpack.c.l.b16 %v173
    %v770 = vunpack.c.h.b16 %v173
    %v771 = vunpack.c.l.b16 %v174
    %v772 = vunpack.c.h.b16 %v174
    %v773 = vunpack.c.l.b16 %v175
    %v774 = vunpack.c.h.b16 %v175
    %v775 = vunpack.c.l.b16 %v176
    %v776 = vunpack.c.h.b16 %v176
    %v777 = vunpack.c.l.b16 %v177
    %v778 = vunpack.c.h.b16 %v177
    %v779 = vunpack.c.l.b16 %v178
    %v780 = vunpack.c.h.b16 %v178
    %v781 = vunpack.c.l.b16 %v179
    %v782 = vunpack.c.h.b16 %v179
    %v783 = vunpack.c.l.b16 %v180
    %v784 = vunpack.c.h.b16 %v180
    %v785 = vunpack.c.l.b16 %v181
    %v786 = vunpack.c.h.b16 %v181
    %v787 = vunpack.c.l.b16 %v182
    %v788 = vunpack.c.h.b16 %v182
    %v789 = vunpack.c.l.b16 %v183
    %v790 = vunpack.c.h.b16 %v183
    %v791 = vunpack.c.l.b16 %v184
    %v792 = vunpack.c.h.b16 %v184
    %v793 = vunpack.c.l.b16 %v185
    %v794 = vunpack.c.h.b16 %v185
    %v795 = vunpack.c.l.b16 %v186
    %v796 = vunpack.c.h.b16 %v186
    %v797 = vunpack.c.l.b16 %v187
    %v798 = vunpack.c.h.b16 %v187
    %v799 = vunpack.c.l.b16 %v188
    %v800 = vunpack.c.h.b16 %v188
    %v801 = vunpack.c.l.b16 %v189
    %v802 = vunpack.c.h.b16 %v189
    %v803 = vunpack.c.l.b16 %v190
    %v804 = vunpack.c.h.b16 %v190
    %v805 = vunpack.c.l.b16 %v191
    %v806 = vunpack.c.h.b16 %v191
    %v807 = vunpack.c.l.b16 %v192
    %v808 = vunpack.c.h.b16 %v192
    %v809 = vunpack.c.l.b16 %v193
    %v810 = vunpack.c.h.b16 %v193
    %v811 = vunpack.c.l.b16 %v194
    %v812 = vunpack.c.h.b16 %v194
    %v813 = vunpack.c.l.b16 %v195
    %v814 = vunpack.c.h.b16 %v195
    %v815 = vunpack.c.l.b16 %v196
    %v816 = vunpack.c.h.b16 %v196
    %v817 = vunpack.c.l.b16 %v197
    %v818 = vunpack.c.h.b16 %v197
    %v819 = vunpack.c.l.b16 %v198
    %v820 = vunpack.c.h.b16 %v198
    %v821 = vunpack.c.l.b16 %v199
    %v822 = vunpack.c.h.b16 %v199
    %v823 = vunpack.c.l.b16 %v200
    %v824 = vunpack.c.h.b16 %v200
    %v825 = vunpack.c.l.b16 %v201
    %v826 = vunpack.c.h.b16 %v201
    %v827 = vunpack.c.l.b16 %v202
    %v828 = vunpack.c.h.b16 %v202
    %v829 = vunpack.c.l.b16 %v203
    %v830 = vunpack.c.h.b16 %v203
    %v831 = vunpack.c.l.b16 %v204
    %v832 = vunpack.c.h.b16 %v204
    %v833 = vunpack.c.l.b16 %v205
    %v834 = vunpack.c.h.b16 %v205
    %v835 = vunpack.c.l.b16 %v206
    %v836 = vunpack.c.h.b16 %v206
    %v837 = vunpack.c.l.b16 %v207
    %v838 = vunpack.c.h.b16 %v207
    %v839 = vunpack.c.l.b16 %v208
    %v840 = vunpack.c.h.b16 %v208
    %v841 = vunpack.c.l.b16 %v209
    %v842 = vunpack.c.h.b16 %v209
    %v843 = vunpack.c.l.b16 %v210
    %v844 = vunpack.c.h.b16 %v210
    %v845 = vunpack.c.l.b16 %v211
    %v846 = vunpack.c.h.b16 %v211
    %v847 = vunpack.c.l.b16 %v212
    %v848 = vunpack.c.h.b16 %v212
    %v849 = vunpack.c.l.b16 %v213
    %v850 = vunpack.c.h.b16 %v213
    %v851 = vunpack.c.l.b16 %v214
    %v852 = vunpack.c.h.b16 %v214
    %v853 = vunpack.c.l.b16 %v215
    %v854 = vunpack.c.h.b16 %v215
    %v855 = vunpack.c.l.b16 %v216
    %v856 = vunpack.c.h.b16 %v216
    %v857 = vunpack.c.l.b16 %v217
    %v858 = vunpack.c.h.b16 %v217
    %v859 = vunpack.c.l.b16 %v218
    %v860 = vunpack.c.h.b16 %v218
    %v861 = vpack.c.b16 %v609, %v605
    %v862 = vpack.c.b16 %v610, %v606
    %v863 = vpack.c.b16 %v611, %v607
    %v864 = vpack.c.b16 %v612, %v608
    %v865 = vpack.c.b16 %v617, %v613
    %v866 = vpack.c.b16 %v618, %v614
    %v867 = vpack.c.b16 %v619, %v615
    %v868 = vpack.c.b16 %v620, %v616
    %v869 = vpack.c.b16 %v625, %v621
    %v870 = vpack.c.b16 %v626, %v622
    %v871 = vpack.c.b16 %v627, %v623
    %v872 = vpack.c.b16 %v628, %v624
    %v873 = vpack.c.b16 %v633, %v629
    %v874 = vpack.c.b16 %v634, %v630
    %v875 = vpack.c.b16 %v635, %v631
    %v876 = vpack.c.b16 %v636, %v632
    %v877 = vpack.c.b16 %v641, %v637
    %v878 = vpack.c.b16 %v642, %v638
    %v879 = vpack.c.b16 %v643, %v639
    %v880 = vpack.c.b16 %v644, %v640
    %v881 = vpack.c.b16 %v649, %v645
    %v882 = vpack.c.b16 %v650, %v646
    %v883 = vpack.c.b16 %v651, %v647
    %v884 = vpack.c.b16 %v652, %v648
    %v885 = vpack.c.b16 %v657, %v653
    %v886 = vpack.c.b16 %v658, %v654
    %v887 = vpack.c.b16 %v659, %v655
    %v888 = vpack.c.b16 %v660, %v656
    %v889 = vpack.c.b16 %v665, %v661
    %v890 = vpack.c.b16 %v666, %v662
    %v891 = vpack.c.b16 %v667, %v663
    %v892 = vpack.c.b16 %v668, %v664
    %v893 = vpack.c.b16 %v673, %v669
    %v894 = vpack.c.b16 %v674, %v670
    %v895 = vpack.c.b16 %v675, %v671
    %v896 = vpack.c.b16 %v676, %v672
    %v897 = vpack.c.b16 %v681, %v677
    %v898 = vpack.c.b16 %v682, %v678
    %v899 = vpack.c.b16 %v683, %v679
    %v900 = vpack.c.b16 %v684, %v680
    %v901 = vpack.c.b16 %v689, %v685
    %v902 = vpack.c.b16 %v690, %v686
    %v903 = vpack.c.b16 %v691, %v687
    %v904 = vpack.c.b16 %v692, %v688
    %v905 = vpack.c.b16 %v697, %v693
    %v906 = vpack.c.b16 %v698, %v694
    %v907 = vpack.c.b16 %v699, %v695
    %v908 = vpack.c.b16 %v700, %v696
    %v909 = vpack.c.b16 %v705, %v701
    %v910 = vpack.c.b16 %v706, %v702
    %v911 = vpack.c.b16 %v707, %v703
    %v912 = vpack.c.b16 %v708, %v704
    %v913 = vpack.c.b16 %v713, %v709
    %v914 = vpack.c.b16 %v714, %v710
    %v915 = vpack.c.b16 %v715, %v711
    %v916 = vpack.c.b16 %v716, %v712
    %v917 = vpack.c.b16 %v721, %v717
    %v918 = vpack.c.b16 %v722, %v718
    %v919 = vpack.c.b16 %v723, %v719
    %v920 = vpack.c.b16 %v724, %v720
    %v921 = vpack.c.b16 %v729, %v725
    %v922 = vpack.c.b16 %v730, %v726
    %v923 = vpack.c.b16 %v731, %v727
    %v924 = vpack.c.b16 %v732, %v728
    %v925 = vpack.c.b16 %v737, %v733
    %v926 = vpack.c.b16 %v738, %v734
    %v927 = vpack.c.b16 %v739, %v735
    %v928 = vpack.c.b16 %v740, %v736
    %v929 = vpack.c.b16 %v745, %v741
    %v930 = vpack.c.b16 %v746, %v742
    %v931 = vpack.c.b16 %v747, %v743
    %v932 = vpack.c.b16 %v748, %v744
    %v933 = vpack.c.b16 %v753, %v749
    %v934 = vpack.c.b16 %v754, %v750
    %v935 = vpack.c.b16 %v755, %v751
    %v936 = vpack.c.b16 %v756, %v752
    %v937 = vpack.c.b16 %v761, %v757
    %v938 = vpack.c.b16 %v762, %v758
    %v939 = vpack.c.b16 %v763, %v759
    %v940 = vpack.c.b16 %v764, %v760
    %v941 = vpack.c.b16 %v769, %v765
    %v942 = vpack.c.b16 %v770, %v766
    %v943 = vpack.c.b16 %v771, %v767
    %v944 = vpack.c.b16 %v772, %v768
    %v945 = vpack.c.b16 %v777, %v773
    %v946 = vpack.c.b16 %v778, %v774
    %v947 = vpack.c.b16 %v779, %v775
    %v948 = vpack.c.b16 %v780, %v776
    %v949 = vpack.c.b16 %v785, %v781
    %v950 = vpack.c.b16 %v786, %v782
    %v951 = vpack.c.b16 %v787, %v783
    %v952 = vpack.c.b16 %v788, %v784
    %v953 = vpack.c.b16 %v793, %v789
    %v954 = vpack.c.b16 %v794, %v790
    %v955 = vpack.c.b16 %v795, %v791
    %v956 = vpack.c.b16 %v796, %v792
    %v957 = vpack.c.b16 %v801, %v797
    %v958 = vpack.c.b16 %v802, %v798
    %v959 = vpack.c.b16 %v803, %v799
    %v960 = vpack.c.b16 %v804, %v800
    %v961 = vpack.c.b16 %v809, %v805
    %v962 = vpack.c.b16 %v810, %v806
    %v963 = vpack.c.b16 %v811, %v807
    %v964 = vpack.c.b16 %v812, %v808
    %v965 = vpack.c.b16 %v817, %v813
    %v966 = vpack.c.b16 %v818, %v814
    %v967 = vpack.c.b16 %v819, %v815
    %v968 = vpack.c.b16 %v820, %v816
    %v969 = vpack.c.b16 %v825, %v821
    %v970 = vpack.c.b16 %v826, %v822
    %v971 = vpack.c.b16 %v827, %v823
    %v972 = vpack.c.b16 %v828, %v824
    %v973 = vpack.c.b16 %v833, %v829
    %v974 = vpack.c.b16 %v834, %v830
    %v975 = vpack.c.b16 %v835, %v831
    %v976 = vpack.c.b16 %v836, %v832
    %v977 = vpack.c.b16 %v841, %v837
    %v978 = vpack.c.b16 %v842, %v838
    %v979 = vpack.c.b16 %v843, %v839
    %v980 = vpack.c.b16 %v844, %v840
    %v981 = vpack.c.b16 %v849, %v845
    %v982 = vpack.c.b16 %v850, %v846
    %v983 = vpack.c.b16 %v851, %v847
    %v984 = vpack.c.b16 %v852, %v848
    %v985 = vpack.c.b16 %v857, %v853
    %v986 = vpack.c.b16 %v858, %v854
    %v987 = vpack.c.b16 %v859, %v855
    %v988 = vpack.c.b16 %v860, %v856
    %1117 = vmatprep.subr.bf16.mxu0 %v862
    %1118 = vmatpush1.bf16.msra.mxu0 %v861
    %1119 = vmatprep.subr.bf16.mxu0 %v866
    %1120 = vmatpush1.bf16.msra.mxu0 %v865
    %1121 = vmatprep.subr.bf16.mxu0 %v870
    %1122 = vmatpush1.bf16.msra.mxu0 %v869
    %1123 = vmatprep.subr.bf16.mxu0 %v874
    %1124 = vmatpush1.bf16.msra.mxu0 %v873
    %1125 = vmatprep.subr.bf16.mxu0 %v878
    %1126 = vmatpush1.bf16.msra.mxu0 %v877
    %1127 = vmatprep.subr.bf16.mxu0 %v882
    %1128 = vmatpush1.bf16.msra.mxu0 %v881
    %1129 = vmatprep.subr.bf16.mxu0 %v886
    %1130 = vmatpush1.bf16.msra.mxu0 %v885
    %1131 = vmatprep.subr.bf16.mxu0 %v890
    %1132 = vmatpush1.bf16.msra.mxu0 %v889
    %1133 = vmatprep.subr.bf16.mxu0 %v894
    %1134 = vmatpush1.bf16.msra.mxu0 %v893
    %1135 = vmatprep.subr.bf16.mxu0 %v898
    %1136 = vmatpush1.bf16.msra.mxu0 %v897
    %1137 = vmatprep.subr.bf16.mxu0 %v902
    %1138 = vmatpush1.bf16.msra.mxu0 %v901
    %1139 = vmatprep.subr.bf16.mxu0 %v906
    %1140 = vmatpush1.bf16.msra.mxu0 %v905
    %1141 = vmatprep.subr.bf16.mxu0 %v910
    %1142 = vmatpush1.bf16.msra.mxu0 %v909
    %1143 = vmatprep.subr.bf16.mxu0 %v914
    %1144 = vmatpush1.bf16.msra.mxu0 %v913
    %1145 = vmatprep.subr.bf16.mxu0 %v918
    %1146 = vmatpush1.bf16.msra.mxu0 %v917
    %1147 = vmatprep.subr.bf16.mxu0 %v922
    %1148 = vmatpush1.bf16.msra.mxu0 %v921
    %1149 = vmatprep.mubr.bf16.mxu0 %v88
    %1150 = vmatmul.mubr.bf16.gmra.mrb[0].mxu0 %v87
    %v1151 = vpop.f32.mrb[0].mxu0
    %v1152 = vadd.f32 0.0, %v1151
    %v1153 = vpop.f32.mrb[0].mxu0
    %v1154 = vadd.f32 0.0, %v1153
    %v1155 = vpop.f32.mrb[0].mxu0
    %v1156 = vadd.f32 0.0, %v1155
    %v1157 = vpop.f32.mrb[0].mxu0
    %v1158 = vadd.f32 0.0, %v1157
    %1159 = vdwg.mxu0
    %1160 = vmatprep.subr.bf16.mxu0 %v926
    %1161 = vmatpush1.bf16.msra.mxu0 %v925
    %1162 = vmatprep.subr.bf16.mxu0 %v930
    %1163 = vmatpush1.bf16.msra.mxu0 %v929
    %1164 = vmatprep.subr.bf16.mxu0 %v934
    %1165 = vmatpush1.bf16.msra.mxu0 %v933
    %1166 = vmatprep.subr.bf16.mxu0 %v938
    %1167 = vmatpush1.bf16.msra.mxu0 %v937
    %1168 = vmatprep.subr.bf16.mxu0 %v942
    %1169 = vmatpush1.bf16.msra.mxu0 %v941
    %1170 = vmatprep.subr.bf16.mxu0 %v946
    %1171 = vmatpush1.bf16.msra.mxu0 %v945
    %1172 = vmatprep.subr.bf16.mxu0 %v950
    %1173 = vmatpush1.bf16.msra.mxu0 %v949
    %1174 = vmatprep.subr.bf16.mxu0 %v954
    %1175 = vmatpush1.bf16.msra.mxu0 %v953
    %1176 = vmatprep.subr.bf16.mxu0 %v958
    %1177 = vmatpush1.bf16.msra.mxu0 %v957
    %1178 = vmatprep.subr.bf16.mxu0 %v962
    %1179 = vmatpush1.bf16.msra.mxu0 %v961
    %1180 = vmatprep.subr.bf16.mxu0 %v966
    %1181 = vmatpush1.bf16.msra.mxu0 %v965
    %1182 = vmatprep.subr.bf16.mxu0 %v970
    %1183 = vmatpush1.bf16.msra.mxu0 %v969
    %1184 = vmatprep.subr.bf16.mxu0 %v974
    %1185 = vmatpush1.bf16.msra.mxu0 %v973
    %1186 = vmatprep.subr.bf16.mxu0 %v978
    %1187 = vmatpush1.bf16.msra.mxu0 %v977
    %1188 = vmatprep.subr.bf16.mxu0 %v982
    %1189 = vmatpush1.bf16.msra.mxu0 %v981
    %1190 = vmatprep.subr.bf16.mxu0 %v986
    %1191 = vmatpush1.bf16.msra.mxu0 %v985
    %1192 = vmatprep.mubr.bf16.mxu0 %v90
    %1193 = vmatmul.mubr.bf16.gmra.mrb[0].mxu0 %v89
    %v1194 = vpop.f32.mrb[0].mxu0
    %v1195 = vadd.f32 %v1152, %v1194
    %v1196 = vpop.f32.mrb[0].mxu0
    %v1197 = vadd.f32 %v1154, %v1196
    %v1198 = vpop.f32.mrb[0].mxu0
    %v1199 = vadd.f32 %v1156, %v1198
    %v1200 = vpop.f32.mrb[0].mxu0
    %v1201 = vadd.f32 %v1158, %v1200
    %1202 = vdwg.mxu0
    %1203 = vmatprep.subr.bf16.mxu0 %v864
    %1204 = vmatpush1.bf16.msra.mxu0 %v863
    %1205 = vmatprep.subr.bf16.mxu0 %v868
    %1206 = vmatpush1.bf16.msra.mxu0 %v867
    %1207 = vmatprep.subr.bf16.mxu0 %v872
    %1208 = vmatpush1.bf16.msra.mxu0 %v871
    %1209 = vmatprep.subr.bf16.mxu0 %v876
    %1210 = vmatpush1.bf16.msra.mxu0 %v875
    %1211 = vmatprep.subr.bf16.mxu0 %v880
    %1212 = vmatpush1.bf16.msra.mxu0 %v879
    %1213 = vmatprep.subr.bf16.mxu0 %v884
    %1214 = vmatpush1.bf16.msra.mxu0 %v883
    %1215 = vmatprep.subr.bf16.mxu0 %v888
    %1216 = vmatpush1.bf16.msra.mxu0 %v887
    %1217 = vmatprep.subr.bf16.mxu0 %v892
    %1218 = vmatpush1.bf16.msra.mxu0 %v891
    %1219 = vmatprep.subr.bf16.mxu0 %v896
    %1220 = vmatpush1.bf16.msra.mxu0 %v895
    %1221 = vmatprep.subr.bf16.mxu0 %v900
    %1222 = vmatpush1.bf16.msra.mxu0 %v899
    %1223 = vmatprep.subr.bf16.mxu0 %v904
    %1224 = vmatpush1.bf16.msra.mxu0 %v903
    %1225 = vmatprep.subr.bf16.mxu0 %v908
    %1226 = vmatpush1.bf16.msra.mxu0 %v907
    %1227 = vmatprep.subr.bf16.mxu0 %v912
    %1228 = vmatpush1.bf16.msra.mxu0 %v911
    %1229 = vmatprep.subr.bf16.mxu0 %v916
    %1230 = vmatpush1.bf16.msra.mxu0 %v915
    %1231 = vmatprep.subr.bf16.mxu0 %v920
    %1232 = vmatpush1.bf16.msra.mxu0 %v919
    %1233 = vmatprep.subr.bf16.mxu0 %v924
    %1234 = vmatpush1.bf16.msra.mxu0 %v923
    %1235 = vmatprep.mubr.bf16.mxu0 %v88
    %1236 = vmatmul.mubr.bf16.gmra.mrb[0].mxu0 %v87
    %v1237 = vpop.f32.mrb[0].mxu0
    %v1238 = vadd.f32 0.0, %v1237
    %v1239 = vpop.f32.mrb[0].mxu0
    %v1240 = vadd.f32 0.0, %v1239
    %v1241 = vpop.f32.mrb[0].mxu0
    %v1242 = vadd.f32 0.0, %v1241
    %v1243 = vpop.f32.mrb[0].mxu0
    %v1244 = vadd.f32 0.0, %v1243
    %1245 = vdwg.mxu0
    %1246 = vmatprep.subr.bf16.mxu0 %v928
    %1247 = vmatpush1.bf16.msra.mxu0 %v927
    %1248 = vmatprep.subr.bf16.mxu0 %v932
    %1249 = vmatpush1.bf16.msra.mxu0 %v931
    %1250 = vmatprep.subr.bf16.mxu0 %v936
    %1251 = vmatpush1.bf16.msra.mxu0 %v935
    %1252 = vmatprep.subr.bf16.mxu0 %v940
    %1253 = vmatpush1.bf16.msra.mxu0 %v939
    %1254 = vmatprep.subr.bf16.mxu0 %v944
    %1255 = vmatpush1.bf16.msra.mxu0 %v943
    %1256 = vmatprep.subr.bf16.mxu0 %v948
    %1257 = vmatpush1.bf16.msra.mxu0 %v947
    %1258 = vmatprep.subr.bf16.mxu0 %v952
    %1259 = vmatpush1.bf16.msra.mxu0 %v951
    %1260 = vmatprep.subr.bf16.mxu0 %v956
    %1261 = vmatpush1.bf16.msra.mxu0 %v955
    %1262 = vmatprep.subr.bf16.mxu0 %v960
    %1263 = vmatpush1.bf16.msra.mxu0 %v959
    %1264 = vmatprep.subr.bf16.mxu0 %v964
    %1265 = vmatpush1.bf16.msra.mxu0 %v963
    %1266 = vmatprep.subr.bf16.mxu0 %v968
    %1267 = vmatpush1.bf16.msra.mxu0 %v967
    %1268 = vmatprep.subr.bf16.mxu0 %v972
    %1269 = vmatpush1.bf16.msra.mxu0 %v971
    %1270 = vmatprep.subr.bf16.mxu0 %v976
    %1271 = vmatpush1.bf16.msra.mxu0 %v975
    %1272 = vmatprep.subr.bf16.mxu0 %v980
    %1273 = vmatpush1.bf16.msra.mxu0 %v979
    %1274 = vmatprep.subr.bf16.mxu0 %v984
    %1275 = vmatpush1.bf16.msra.mxu0 %v983
    %1276 = vmatprep.subr.bf16.mxu0 %v988
    %1277 = vmatpush1.bf16.msra.mxu0 %v987
    %1278 = vmatprep.mubr.bf16.mxu0 %v90
    %1279 = vmatmul.mubr.bf16.gmra.mrb[0].mxu0 %v89
    %v1280 = vpop.f32.mrb[0].mxu0
    %v1281 = vadd.f32 %v1238, %v1280
    %v1282 = vpop.f32.mrb[0].mxu0
    %v1283 = vadd.f32 %v1240, %v1282
    %v1284 = vpop.f32.mrb[0].mxu0
    %v1285 = vadd.f32 %v1242, %v1284
    %v1286 = vpop.f32.mrb[0].mxu0
    %v1287 = vadd.f32 %v1244, %v1286
    %1288 = vdwg.mxu0
    %v1289 = vmax.f32 %v1195, 0.0
    %v1290 = vmax.f32 %v1197, 0.0
    %v1291 = vmax.f32 %v1281, 0.0
    %v1292 = vmax.f32 %v1283, 0.0
    %v1293 = vmax.f32 %v1199, 0.0
    %v1294 = vmax.f32 %v1201, 0.0
    %v1295 = vmax.f32 %v1285, 0.0
    %v1296 = vmax.f32 %v1287, 0.0
    %v1297 = vpack.c.bf16 %v1293, %v1289
    %v1298 = vpack.c.bf16 %v1294, %v1290
    %v1299 = vpack.c.bf16 %v1295, %v1291
    %v1300 = vpack.c.bf16 %v1296, %v1292
    %v1302 = vlaneseq
    %v1303 = vshrl.u32 %v1302, 7
    %v1304 = vsub.s32 0, %v1303
    %v1305 = vrot.slane %v476, %v1304
    %v1306 = vlaneseq
    %v1307 = vshrl.u32 %v1306, 7
    %v1308 = vsub.s32 1, %v1307
    %v1309 = vrot.slane %v476, %v1308
    %v1310 = vlaneseq
    %v1311 = vshrl.u32 %v1310, 7
    %v1312 = vsub.s32 2, %v1311
    %v1313 = vrot.slane %v476, %v1312
    %v1314 = vlaneseq
    %v1315 = vshrl.u32 %v1314, 7
    %v1316 = vsub.s32 3, %v1315
    %v1317 = vrot.slane %v476, %v1316
    %1322 = vmatprep.subr.bf16.mxu0 %v862
    %1323 = vmatpush1.bf16.msra.mxu0 %v861
    %1324 = vmatprep.subr.bf16.mxu0 %v866
    %1325 = vmatpush1.bf16.msra.mxu0 %v865
    %1326 = vmatprep.subr.bf16.mxu0 %v870
    %1327 = vmatpush1.bf16.msra.mxu0 %v869
    %1328 = vmatprep.subr.bf16.mxu0 %v874
    %1329 = vmatpush1.bf16.msra.mxu0 %v873
    %1330 = vmatprep.subr.bf16.mxu0 %v878
    %1331 = vmatpush1.bf16.msra.mxu0 %v877
    %1332 = vmatprep.subr.bf16.mxu0 %v882
    %1333 = vmatpush1.bf16.msra.mxu0 %v881
    %1334 = vmatprep.subr.bf16.mxu0 %v886
    %1335 = vmatpush1.bf16.msra.mxu0 %v885
    %1336 = vmatprep.subr.bf16.mxu0 %v890
    %1337 = vmatpush1.bf16.msra.mxu0 %v889
    %1338 = vmatprep.subr.bf16.mxu0 %v894
    %1339 = vmatpush1.bf16.msra.mxu0 %v893
    %1340 = vmatprep.subr.bf16.mxu0 %v898
    %1341 = vmatpush1.bf16.msra.mxu0 %v897
    %1342 = vmatprep.subr.bf16.mxu0 %v902
    %1343 = vmatpush1.bf16.msra.mxu0 %v901
    %1344 = vmatprep.subr.bf16.mxu0 %v906
    %1345 = vmatpush1.bf16.msra.mxu0 %v905
    %1346 = vmatprep.subr.bf16.mxu0 %v910
    %1347 = vmatpush1.bf16.msra.mxu0 %v909
    %1348 = vmatprep.subr.bf16.mxu0 %v914
    %1349 = vmatpush1.bf16.msra.mxu0 %v913
    %1350 = vmatprep.subr.bf16.mxu0 %v918
    %1351 = vmatpush1.bf16.msra.mxu0 %v917
    %1352 = vmatprep.subr.bf16.mxu0 %v922
    %1353 = vmatpush1.bf16.msra.mxu0 %v921
    %1354 = vmatprep.mubr.bf16.mxu0 %v1298
    %1355 = vmatmul.mubr.bf16.gmra.mrb[0].mxu0 %v1297
    %v1356 = vpop.f32.mrb[0].mxu0
    %v1357 = vadd.f32 %v1305, %v1356
    %v1358 = vpop.f32.mrb[0].mxu0
    %v1359 = vadd.f32 %v1309, %v1358
    %v1360 = vpop.f32.mrb[0].mxu0
    %v1361 = vadd.f32 %v1305, %v1360
    %v1362 = vpop.f32.mrb[0].mxu0
    %v1363 = vadd.f32 %v1309, %v1362
    %1364 = vdwg.mxu0
    %1365 = vmatprep.subr.bf16.mxu0 %v926
    %1366 = vmatpush1.bf16.msra.mxu0 %v925
    %1367 = vmatprep.subr.bf16.mxu0 %v930
    %1368 = vmatpush1.bf16.msra.mxu0 %v929
    %1369 = vmatprep.subr.bf16.mxu0 %v934
    %1370 = vmatpush1.bf16.msra.mxu0 %v933
    %1371 = vmatprep.subr.bf16.mxu0 %v938
    %1372 = vmatpush1.bf16.msra.mxu0 %v937
    %1373 = vmatprep.subr.bf16.mxu0 %v942
    %1374 = vmatpush1.bf16.msra.mxu0 %v941
    %1375 = vmatprep.subr.bf16.mxu0 %v946
    %1376 = vmatpush1.bf16.msra.mxu0 %v945
    %1377 = vmatprep.subr.bf16.mxu0 %v950
    %1378 = vmatpush1.bf16.msra.mxu0 %v949
    %1379 = vmatprep.subr.bf16.mxu0 %v954
    %1380 = vmatpush1.bf16.msra.mxu0 %v953
    %1381 = vmatprep.subr.bf16.mxu0 %v958
    %1382 = vmatpush1.bf16.msra.mxu0 %v957
    %1383 = vmatprep.subr.bf16.mxu0 %v962
    %1384 = vmatpush1.bf16.msra.mxu0 %v961
    %1385 = vmatprep.subr.bf16.mxu0 %v966
    %1386 = vmatpush1.bf16.msra.mxu0 %v965
    %1387 = vmatprep.subr.bf16.mxu0 %v970
    %1388 = vmatpush1.bf16.msra.mxu0 %v969
    %1389 = vmatprep.subr.bf16.mxu0 %v974
    %1390 = vmatpush1.bf16.msra.mxu0 %v973
    %1391 = vmatprep.subr.bf16.mxu0 %v978
    %1392 = vmatpush1.bf16.msra.mxu0 %v977
    %1393 = vmatprep.subr.bf16.mxu0 %v982
    %1394 = vmatpush1.bf16.msra.mxu0 %v981
    %1395 = vmatprep.subr.bf16.mxu0 %v986
    %1396 = vmatpush1.bf16.msra.mxu0 %v985
    %1397 = vmatprep.mubr.bf16.mxu0 %v1300
    %1398 = vmatmul.mubr.bf16.gmra.mrb[0].mxu0 %v1299
    %v1399 = vpop.f32.mrb[0].mxu0
    %v1400 = vadd.f32 %v1357, %v1399
    %v1401 = vpop.f32.mrb[0].mxu0
    %v1402 = vadd.f32 %v1359, %v1401
    %v1403 = vpop.f32.mrb[0].mxu0
    %v1404 = vadd.f32 %v1361, %v1403
    %v1405 = vpop.f32.mrb[0].mxu0
    %v1406 = vadd.f32 %v1363, %v1405
    %1407 = vdwg.mxu0
    %1408 = vmatprep.subr.bf16.mxu0 %v864
    %1409 = vmatpush1.bf16.msra.mxu0 %v863
    %1410 = vmatprep.subr.bf16.mxu0 %v868
    %1411 = vmatpush1.bf16.msra.mxu0 %v867
    %1412 = vmatprep.subr.bf16.mxu0 %v872
    %1413 = vmatpush1.bf16.msra.mxu0 %v871
    %1414 = vmatprep.subr.bf16.mxu0 %v876
    %1415 = vmatpush1.bf16.msra.mxu0 %v875
    %1416 = vmatprep.subr.bf16.mxu0 %v880
    %1417 = vmatpush1.bf16.msra.mxu0 %v879
    %1418 = vmatprep.subr.bf16.mxu0 %v884
    %1419 = vmatpush1.bf16.msra.mxu0 %v883
    %1420 = vmatprep.subr.bf16.mxu0 %v888
    %1421 = vmatpush1.bf16.msra.mxu0 %v887
    %1422 = vmatprep.subr.bf16.mxu0 %v892
    %1423 = vmatpush1.bf16.msra.mxu0 %v891
    %1424 = vmatprep.subr.bf16.mxu0 %v896
    %1425 = vmatpush1.bf16.msra.mxu0 %v895
    %1426 = vmatprep.subr.bf16.mxu0 %v900
    %1427 = vmatpush1.bf16.msra.mxu0 %v899
    %1428 = vmatprep.subr.bf16.mxu0 %v904
    %1429 = vmatpush1.bf16.msra.mxu0 %v903
    %1430 = vmatprep.subr.bf16.mxu0 %v908
    %1431 = vmatpush1.bf16.msra.mxu0 %v907
    %1432 = vmatprep.subr.bf16.mxu0 %v912
    %1433 = vmatpush1.bf16.msra.mxu0 %v911
    %1434 = vmatprep.subr.bf16.mxu0 %v916
    %1435 = vmatpush1.bf16.msra.mxu0 %v915
    %1436 = vmatprep.subr.bf16.mxu0 %v920
    %1437 = vmatpush1.bf16.msra.mxu0 %v919
    %1438 = vmatprep.subr.bf16.mxu0 %v924
    %1439 = vmatpush1.bf16.msra.mxu0 %v923
    %1440 = vmatprep.mubr.bf16.mxu0 %v1298
    %1441 = vmatmul.mubr.bf16.gmra.mrb[0].mxu0 %v1297
    %v1442 = vpop.f32.mrb[0].mxu0
    %v1443 = vadd.f32 %v1313, %v1442
    %v1444 = vpop.f32.mrb[0].mxu0
    %v1445 = vadd.f32 %v1317, %v1444
    %v1446 = vpop.f32.mrb[0].mxu0
    %v1447 = vadd.f32 %v1313, %v1446
    %v1448 = vpop.f32.mrb[0].mxu0
    %v1449 = vadd.f32 %v1317, %v1448
    %1450 = vdwg.mxu0
    %1451 = vmatprep.subr.bf16.mxu0 %v928
    %1452 = vmatpush1.bf16.msra.mxu0 %v927
    %1453 = vmatprep.subr.bf16.mxu0 %v932
    %1454 = vmatpush1.bf16.msra.mxu0 %v931
    %1455 = vmatprep.subr.bf16.mxu0 %v936
    %1456 = vmatpush1.bf16.msra.mxu0 %v935
    %1457 = vmatprep.subr.bf16.mxu0 %v940
    %1458 = vmatpush1.bf16.msra.mxu0 %v939
    %1459 = vmatprep.subr.bf16.mxu0 %v944
    %1460 = vmatpush1.bf16.msra.mxu0 %v943
    %1461 = vmatprep.subr.bf16.mxu0 %v948
    %1462 = vmatpush1.bf16.msra.mxu0 %v947
    %1463 = vmatprep.subr.bf16.mxu0 %v952
    %1464 = vmatpush1.bf16.msra.mxu0 %v951
    %1465 = vmatprep.subr.bf16.mxu0 %v956
    %1466 = vmatpush1.bf16.msra.mxu0 %v955
    %1467 = vmatprep.subr.bf16.mxu0 %v960
    %1468 = vmatpush1.bf16.msra.mxu0 %v959
    %1469 = vmatprep.subr.bf16.mxu0 %v964
    %1470 = vmatpush1.bf16.msra.mxu0 %v963
    %1471 = vmatprep.subr.bf16.mxu0 %v968
    %1472 = vmatpush1.bf16.msra.mxu0 %v967
    %1473 = vmatprep.subr.bf16.mxu0 %v972
    %1474 = vmatpush1.bf16.msra.mxu0 %v971
    %1475 = vmatprep.subr.bf16.mxu0 %v976
    %1476 = vmatpush1.bf16.msra.mxu0 %v975
    %1477 = vmatprep.subr.bf16.mxu0 %v980
    %1478 = vmatpush1.bf16.msra.mxu0 %v979
    %1479 = vmatprep.subr.bf16.mxu0 %v984
    %1480 = vmatpush1.bf16.msra.mxu0 %v983
    %1481 = vmatprep.subr.bf16.mxu0 %v988
    %1482 = vmatpush1.bf16.msra.mxu0 %v987
    %1483 = vmatprep.mubr.bf16.mxu0 %v1300
    %1484 = vmatmul.mubr.bf16.gmra.mrb[0].mxu0 %v1299
    %v1485 = vpop.f32.mrb[0].mxu0
    %v1486 = vadd.f32 %v1443, %v1485
    %v1487 = vpop.f32.mrb[0].mxu0
    %v1488 = vadd.f32 %v1445, %v1487
    %v1489 = vpop.f32.mrb[0].mxu0
    %v1490 = vadd.f32 %v1447, %v1489
    %v1491 = vpop.f32.mrb[0].mxu0
    %v1492 = vadd.f32 %v1449, %v1491
    %1493 = vdwg.mxu0
    %v1494 = vpack.c.bf16 %v1404, %v1400
    %v1495 = vpack.c.bf16 %v1406, %v1402
    %v1496 = vpack.c.bf16 %v1490, %v1486
    %v1497 = vpack.c.bf16 %v1492, %v1488
    %v1499 = vlaneseq
    %v1500 = vshrl.u32 %v1499, 7
    %v1501 = vsub.s32 0, %v1500
    %v1502 = vrot.slane %v475, %v1501
    %v1503 = vlaneseq
    %v1504 = vshrl.u32 %v1503, 7
    %v1505 = vsub.s32 1, %v1504
    %v1506 = vrot.slane %v475, %v1505
    %v1507 = vlaneseq
    %v1508 = vshrl.u32 %v1507, 7
    %v1509 = vsub.s32 2, %v1508
    %v1510 = vrot.slane %v475, %v1509
    %v1511 = vlaneseq
    %v1512 = vshrl.u32 %v1511, 7
    %v1513 = vsub.s32 3, %v1512
    %v1514 = vrot.slane %v475, %v1513
    %v1647 = vunpack.c.l.b16 %v347
    %v1648 = vunpack.c.h.b16 %v347
    %v1649 = vunpack.c.l.b16 %v348
    %v1650 = vunpack.c.h.b16 %v348
    %v1651 = vunpack.c.l.b16 %v349
    %v1652 = vunpack.c.h.b16 %v349
    %v1653 = vunpack.c.l.b16 %v350
    %v1654 = vunpack.c.h.b16 %v350
    %v1655 = vunpack.c.l.b16 %v351
    %v1656 = vunpack.c.h.b16 %v351
    %v1657 = vunpack.c.l.b16 %v352
    %v1658 = vunpack.c.h.b16 %v352
    %v1659 = vunpack.c.l.b16 %v353
    %v1660 = vunpack.c.h.b16 %v353
    %v1661 = vunpack.c.l.b16 %v354
    %v1662 = vunpack.c.h.b16 %v354
    %v1663 = vunpack.c.l.b16 %v355
    %v1664 = vunpack.c.h.b16 %v355
    %v1665 = vunpack.c.l.b16 %v356
    %v1666 = vunpack.c.h.b16 %v356
    %v1667 = vunpack.c.l.b16 %v357
    %v1668 = vunpack.c.h.b16 %v357
    %v1669 = vunpack.c.l.b16 %v358
    %v1670 = vunpack.c.h.b16 %v358
    %v1671 = vunpack.c.l.b16 %v359
    %v1672 = vunpack.c.h.b16 %v359
    %v1673 = vunpack.c.l.b16 %v360
    %v1674 = vunpack.c.h.b16 %v360
    %v1675 = vunpack.c.l.b16 %v361
    %v1676 = vunpack.c.h.b16 %v361
    %v1677 = vunpack.c.l.b16 %v362
    %v1678 = vunpack.c.h.b16 %v362
    %v1679 = vunpack.c.l.b16 %v363
    %v1680 = vunpack.c.h.b16 %v363
    %v1681 = vunpack.c.l.b16 %v364
    %v1682 = vunpack.c.h.b16 %v364
    %v1683 = vunpack.c.l.b16 %v365
    %v1684 = vunpack.c.h.b16 %v365
    %v1685 = vunpack.c.l.b16 %v366
    %v1686 = vunpack.c.h.b16 %v366
    %v1687 = vunpack.c.l.b16 %v367
    %v1688 = vunpack.c.h.b16 %v367
    %v1689 = vunpack.c.l.b16 %v368
    %v1690 = vunpack.c.h.b16 %v368
    %v1691 = vunpack.c.l.b16 %v369
    %v1692 = vunpack.c.h.b16 %v369
    %v1693 = vunpack.c.l.b16 %v370
    %v1694 = vunpack.c.h.b16 %v370
    %v1695 = vunpack.c.l.b16 %v371
    %v1696 = vunpack.c.h.b16 %v371
    %v1697 = vunpack.c.l.b16 %v372
    %v1698 = vunpack.c.h.b16 %v372
    %v1699 = vunpack.c.l.b16 %v373
    %v1700 = vunpack.c.h.b16 %v373
    %v1701 = vunpack.c.l.b16 %v374
    %v1702 = vunpack.c.h.b16 %v374
    %v1703 = vunpack.c.l.b16 %v375
    %v1704 = vunpack.c.h.b16 %v375
    %v1705 = vunpack.c.l.b16 %v376
    %v1706 = vunpack.c.h.b16 %v376
    %v1707 = vunpack.c.l.b16 %v377
    %v1708 = vunpack.c.h.b16 %v377
    %v1709 = vunpack.c.l.b16 %v378
    %v1710 = vunpack.c.h.b16 %v378
    %v1711 = vunpack.c.l.b16 %v379
    %v1712 = vunpack.c.h.b16 %v379
    %v1713 = vunpack.c.l.b16 %v380
    %v1714 = vunpack.c.h.b16 %v380
    %v1715 = vunpack.c.l.b16 %v381
    %v1716 = vunpack.c.h.b16 %v381
    %v1717 = vunpack.c.l.b16 %v382
    %v1718 = vunpack.c.h.b16 %v382
    %v1719 = vunpack.c.l.b16 %v383
    %v1720 = vunpack.c.h.b16 %v383
    %v1721 = vunpack.c.l.b16 %v384
    %v1722 = vunpack.c.h.b16 %v384
    %v1723 = vunpack.c.l.b16 %v385
    %v1724 = vunpack.c.h.b16 %v385
    %v1725 = vunpack.c.l.b16 %v386
    %v1726 = vunpack.c.h.b16 %v386
    %v1727 = vunpack.c.l.b16 %v387
    %v1728 = vunpack.c.h.b16 %v387
    %v1729 = vunpack.c.l.b16 %v388
    %v1730 = vunpack.c.h.b16 %v388
    %v1731 = vunpack.c.l.b16 %v389
    %v1732 = vunpack.c.h.b16 %v389
    %v1733 = vunpack.c.l.b16 %v390
    %v1734 = vunpack.c.h.b16 %v390
    %v1735 = vunpack.c.l.b16 %v391
    %v1736 = vunpack.c.h.b16 %v391
    %v1737 = vunpack.c.l.b16 %v392
    %v1738 = vunpack.c.h.b16 %v392
    %v1739 = vunpack.c.l.b16 %v393
    %v1740 = vunpack.c.h.b16 %v393
    %v1741 = vunpack.c.l.b16 %v394
    %v1742 = vunpack.c.h.b16 %v394
    %v1743 = vunpack.c.l.b16 %v395
    %v1744 = vunpack.c.h.b16 %v395
    %v1745 = vunpack.c.l.b16 %v396
    %v1746 = vunpack.c.h.b16 %v396
    %v1747 = vunpack.c.l.b16 %v397
    %v1748 = vunpack.c.h.b16 %v397
    %v1749 = vunpack.c.l.b16 %v398
    %v1750 = vunpack.c.h.b16 %v398
    %v1751 = vunpack.c.l.b16 %v399
    %v1752 = vunpack.c.h.b16 %v399
    %v1753 = vunpack.c.l.b16 %v400
    %v1754 = vunpack.c.h.b16 %v400
    %v1755 = vunpack.c.l.b16 %v401
    %v1756 = vunpack.c.h.b16 %v401
    %v1757 = vunpack.c.l.b16 %v402
    %v1758 = vunpack.c.h.b16 %v402
    %v1759 = vunpack.c.l.b16 %v403
    %v1760 = vunpack.c.h.b16 %v403
    %v1761 = vunpack.c.l.b16 %v404
    %v1762 = vunpack.c.h.b16 %v404
    %v1763 = vunpack.c.l.b16 %v405
    %v1764 = vunpack.c.h.b16 %v405
    %v1765 = vunpack.c.l.b16 %v406
    %v1766 = vunpack.c.h.b16 %v406
    %v1767 = vunpack.c.l.b16 %v407
    %v1768 = vunpack.c.h.b16 %v407
    %v1769 = vunpack.c.l.b16 %v408
    %v1770 = vunpack.c.h.b16 %v408
    %v1771 = vunpack.c.l.b16 %v409
    %v1772 = vunpack.c.h.b16 %v409
    %v1773 = vunpack.c.l.b16 %v410
    %v1774 = vunpack.c.h.b16 %v410
    %v1775 = vunpack.c.l.b16 %v411
    %v1776 = vunpack.c.h.b16 %v411
    %v1777 = vunpack.c.l.b16 %v412
    %v1778 = vunpack.c.h.b16 %v412
    %v1779 = vunpack.c.l.b16 %v413
    %v1780 = vunpack.c.h.b16 %v413
    %v1781 = vunpack.c.l.b16 %v414
    %v1782 = vunpack.c.h.b16 %v414
    %v1783 = vunpack.c.l.b16 %v415
    %v1784 = vunpack.c.h.b16 %v415
    %v1785 = vunpack.c.l.b16 %v416
    %v1786 = vunpack.c.h.b16 %v416
    %v1787 = vunpack.c.l.b16 %v417
    %v1788 = vunpack.c.h.b16 %v417
    %v1789 = vunpack.c.l.b16 %v418
    %v1790 = vunpack.c.h.b16 %v418
    %v1791 = vunpack.c.l.b16 %v419
    %v1792 = vunpack.c.h.b16 %v419
    %v1793 = vunpack.c.l.b16 %v420
    %v1794 = vunpack.c.h.b16 %v420
    %v1795 = vunpack.c.l.b16 %v421
    %v1796 = vunpack.c.h.b16 %v421
    %v1797 = vunpack.c.l.b16 %v422
    %v1798 = vunpack.c.h.b16 %v422
    %v1799 = vunpack.c.l.b16 %v423
    %v1800 = vunpack.c.h.b16 %v423
    %v1801 = vunpack.c.l.b16 %v424
    %v1802 = vunpack.c.h.b16 %v424
    %v1803 = vunpack.c.l.b16 %v425
    %v1804 = vunpack.c.h.b16 %v425
    %v1805 = vunpack.c.l.b16 %v426
    %v1806 = vunpack.c.h.b16 %v426
    %v1807 = vunpack.c.l.b16 %v427
    %v1808 = vunpack.c.h.b16 %v427
    %v1809 = vunpack.c.l.b16 %v428
    %v1810 = vunpack.c.h.b16 %v428
    %v1811 = vunpack.c.l.b16 %v429
    %v1812 = vunpack.c.h.b16 %v429
    %v1813 = vunpack.c.l.b16 %v430
    %v1814 = vunpack.c.h.b16 %v430
    %v1815 = vunpack.c.l.b16 %v431
    %v1816 = vunpack.c.h.b16 %v431
    %v1817 = vunpack.c.l.b16 %v432
    %v1818 = vunpack.c.h.b16 %v432
    %v1819 = vunpack.c.l.b16 %v433
    %v1820 = vunpack.c.h.b16 %v433
    %v1821 = vunpack.c.l.b16 %v434
    %v1822 = vunpack.c.h.b16 %v434
    %v1823 = vunpack.c.l.b16 %v435
    %v1824 = vunpack.c.h.b16 %v435
    %v1825 = vunpack.c.l.b16 %v436
    %v1826 = vunpack.c.h.b16 %v436
    %v1827 = vunpack.c.l.b16 %v437
    %v1828 = vunpack.c.h.b16 %v437
    %v1829 = vunpack.c.l.b16 %v438
    %v1830 = vunpack.c.h.b16 %v438
    %v1831 = vunpack.c.l.b16 %v439
    %v1832 = vunpack.c.h.b16 %v439
    %v1833 = vunpack.c.l.b16 %v440
    %v1834 = vunpack.c.h.b16 %v440
    %v1835 = vunpack.c.l.b16 %v441
    %v1836 = vunpack.c.h.b16 %v441
    %v1837 = vunpack.c.l.b16 %v442
    %v1838 = vunpack.c.h.b16 %v442
    %v1839 = vunpack.c.l.b16 %v443
    %v1840 = vunpack.c.h.b16 %v443
    %v1841 = vunpack.c.l.b16 %v444
    %v1842 = vunpack.c.h.b16 %v444
    %v1843 = vunpack.c.l.b16 %v445
    %v1844 = vunpack.c.h.b16 %v445
    %v1845 = vunpack.c.l.b16 %v446
    %v1846 = vunpack.c.h.b16 %v446
    %v1847 = vunpack.c.l.b16 %v447
    %v1848 = vunpack.c.h.b16 %v447
    %v1849 = vunpack.c.l.b16 %v448
    %v1850 = vunpack.c.h.b16 %v448
    %v1851 = vunpack.c.l.b16 %v449
    %v1852 = vunpack.c.h.b16 %v449
    %v1853 = vunpack.c.l.b16 %v450
    %v1854 = vunpack.c.h.b16 %v450
    %v1855 = vunpack.c.l.b16 %v451
    %v1856 = vunpack.c.h.b16 %v451
    %v1857 = vunpack.c.l.b16 %v452
    %v1858 = vunpack.c.h.b16 %v452
    %v1859 = vunpack.c.l.b16 %v453
    %v1860 = vunpack.c.h.b16 %v453
    %v1861 = vunpack.c.l.b16 %v454
    %v1862 = vunpack.c.h.b16 %v454
    %v1863 = vunpack.c.l.b16 %v455
    %v1864 = vunpack.c.h.b16 %v455
    %v1865 = vunpack.c.l.b16 %v456
    %v1866 = vunpack.c.h.b16 %v456
    %v1867 = vunpack.c.l.b16 %v457
    %v1868 = vunpack.c.h.b16 %v457
    %v1869 = vunpack.c.l.b16 %v458
    %v1870 = vunpack.c.h.b16 %v458
    %v1871 = vunpack.c.l.b16 %v459
    %v1872 = vunpack.c.h.b16 %v459
    %v1873 = vunpack.c.l.b16 %v460
    %v1874 = vunpack.c.h.b16 %v460
    %v1875 = vunpack.c.l.b16 %v461
    %v1876 = vunpack.c.h.b16 %v461
    %v1877 = vunpack.c.l.b16 %v462
    %v1878 = vunpack.c.h.b16 %v462
    %v1879 = vunpack.c.l.b16 %v463
    %v1880 = vunpack.c.h.b16 %v463
    %v1881 = vunpack.c.l.b16 %v464
    %v1882 = vunpack.c.h.b16 %v464
    %v1883 = vunpack.c.l.b16 %v465
    %v1884 = vunpack.c.h.b16 %v465
    %v1885 = vunpack.c.l.b16 %v466
    %v1886 = vunpack.c.h.b16 %v466
    %v1887 = vunpack.c.l.b16 %v467
    %v1888 = vunpack.c.h.b16 %v467
    %v1889 = vunpack.c.l.b16 %v468
    %v1890 = vunpack.c.h.b16 %v468
    %v1891 = vunpack.c.l.b16 %v469
    %v1892 = vunpack.c.h.b16 %v469
    %v1893 = vunpack.c.l.b16 %v470
    %v1894 = vunpack.c.h.b16 %v470
    %v1895 = vunpack.c.l.b16 %v471
    %v1896 = vunpack.c.h.b16 %v471
    %v1897 = vunpack.c.l.b16 %v472
    %v1898 = vunpack.c.h.b16 %v472
    %v1899 = vunpack.c.l.b16 %v473
    %v1900 = vunpack.c.h.b16 %v473
    %v1901 = vunpack.c.l.b16 %v474
    %v1902 = vunpack.c.h.b16 %v474
    %v1903 = vpack.c.b16 %v1651, %v1647
    %v1904 = vpack.c.b16 %v1652, %v1648
    %v1905 = vpack.c.b16 %v1653, %v1649
    %v1906 = vpack.c.b16 %v1654, %v1650
    %v1907 = vpack.c.b16 %v1659, %v1655
    %v1908 = vpack.c.b16 %v1660, %v1656
    %v1909 = vpack.c.b16 %v1661, %v1657
    %v1910 = vpack.c.b16 %v1662, %v1658
    %v1911 = vpack.c.b16 %v1667, %v1663
    %v1912 = vpack.c.b16 %v1668, %v1664
    %v1913 = vpack.c.b16 %v1669, %v1665
    %v1914 = vpack.c.b16 %v1670, %v1666
    %v1915 = vpack.c.b16 %v1675, %v1671
    %v1916 = vpack.c.b16 %v1676, %v1672
    %v1917 = vpack.c.b16 %v1677, %v1673
    %v1918 = vpack.c.b16 %v1678, %v1674
    %v1919 = vpack.c.b16 %v1683, %v1679
    %v1920 = vpack.c.b16 %v1684, %v1680
    %v1921 = vpack.c.b16 %v1685, %v1681
    %v1922 = vpack.c.b16 %v1686, %v1682
    %v1923 = vpack.c.b16 %v1691, %v1687
    %v1924 = vpack.c.b16 %v1692, %v1688
    %v1925 = vpack.c.b16 %v1693, %v1689
    %v1926 = vpack.c.b16 %v1694, %v1690
    %v1927 = vpack.c.b16 %v1699, %v1695
    %v1928 = vpack.c.b16 %v1700, %v1696
    %v1929 = vpack.c.b16 %v1701, %v1697
    %v1930 = vpack.c.b16 %v1702, %v1698
    %v1931 = vpack.c.b16 %v1707, %v1703
    %v1932 = vpack.c.b16 %v1708, %v1704
    %v1933 = vpack.c.b16 %v1709, %v1705
    %v1934 = vpack.c.b16 %v1710, %v1706
    %v1935 = vpack.c.b16 %v1715, %v1711
    %v1936 = vpack.c.b16 %v1716, %v1712
    %v1937 = vpack.c.b16 %v1717, %v1713
    %v1938 = vpack.c.b16 %v1718, %v1714
    %v1939 = vpack.c.b16 %v1723, %v1719
    %v1940 = vpack.c.b16 %v1724, %v1720
    %v1941 = vpack.c.b16 %v1725, %v1721
    %v1942 = vpack.c.b16 %v1726, %v1722
    %v1943 = vpack.c.b16 %v1731, %v1727
    %v1944 = vpack.c.b16 %v1732, %v1728
    %v1945 = vpack.c.b16 %v1733, %v1729
    %v1946 = vpack.c.b16 %v1734, %v1730
    %v1947 = vpack.c.b16 %v1739, %v1735
    %v1948 = vpack.c.b16 %v1740, %v1736
    %v1949 = vpack.c.b16 %v1741, %v1737
    %v1950 = vpack.c.b16 %v1742, %v1738
    %v1951 = vpack.c.b16 %v1747, %v1743
    %v1952 = vpack.c.b16 %v1748, %v1744
    %v1953 = vpack.c.b16 %v1749, %v1745
    %v1954 = vpack.c.b16 %v1750, %v1746
    %v1955 = vpack.c.b16 %v1755, %v1751
    %v1956 = vpack.c.b16 %v1756, %v1752
    %v1957 = vpack.c.b16 %v1757, %v1753
    %v1958 = vpack.c.b16 %v1758, %v1754
    %v1959 = vpack.c.b16 %v1763, %v1759
    %v1960 = vpack.c.b16 %v1764, %v1760
    %v1961 = vpack.c.b16 %v1765, %v1761
    %v1962 = vpack.c.b16 %v1766, %v1762
    %v1963 = vpack.c.b16 %v1771, %v1767
    %v1964 = vpack.c.b16 %v1772, %v1768
    %v1965 = vpack.c.b16 %v1773, %v1769
    %v1966 = vpack.c.b16 %v1774, %v1770
    %v1967 = vpack.c.b16 %v1779, %v1775
    %v1968 = vpack.c.b16 %v1780, %v1776
    %v1969 = vpack.c.b16 %v1781, %v1777
    %v1970 = vpack.c.b16 %v1782, %v1778
    %v1971 = vpack.c.b16 %v1787, %v1783
    %v1972 = vpack.c.b16 %v1788, %v1784
    %v1973 = vpack.c.b16 %v1789, %v1785
    %v1974 = vpack.c.b16 %v1790, %v1786
    %v1975 = vpack.c.b16 %v1795, %v1791
    %v1976 = vpack.c.b16 %v1796, %v1792
    %v1977 = vpack.c.b16 %v1797, %v1793
    %v1978 = vpack.c.b16 %v1798, %v1794
    %v1979 = vpack.c.b16 %v1803, %v1799
    %v1980 = vpack.c.b16 %v1804, %v1800
    %v1981 = vpack.c.b16 %v1805, %v1801
    %v1982 = vpack.c.b16 %v1806, %v1802
    %v1983 = vpack.c.b16 %v1811, %v1807
    %v1984 = vpack.c.b16 %v1812, %v1808
    %v1985 = vpack.c.b16 %v1813, %v1809
    %v1986 = vpack.c.b16 %v1814, %v1810
    %v1987 = vpack.c.b16 %v1819, %v1815
    %v1988 = vpack.c.b16 %v1820, %v1816
    %v1989 = vpack.c.b16 %v1821, %v1817
    %v1990 = vpack.c.b16 %v1822, %v1818
    %v1991 = vpack.c.b16 %v1827, %v1823
    %v1992 = vpack.c.b16 %v1828, %v1824
    %v1993 = vpack.c.b16 %v1829, %v1825
    %v1994 = vpack.c.b16 %v1830, %v1826
    %v1995 = vpack.c.b16 %v1835, %v1831
    %v1996 = vpack.c.b16 %v1836, %v1832
    %v1997 = vpack.c.b16 %v1837, %v1833
    %v1998 = vpack.c.b16 %v1838, %v1834
    %v1999 = vpack.c.b16 %v1843, %v1839
    %v2000 = vpack.c.b16 %v1844, %v1840
    %v2001 = vpack.c.b16 %v1845, %v1841
    %v2002 = vpack.c.b16 %v1846, %v1842
    %v2003 = vpack.c.b16 %v1851, %v1847
    %v2004 = vpack.c.b16 %v1852, %v1848
    %v2005 = vpack.c.b16 %v1853, %v1849
    %v2006 = vpack.c.b16 %v1854, %v1850
    %v2007 = vpack.c.b16 %v1859, %v1855
    %v2008 = vpack.c.b16 %v1860, %v1856
    %v2009 = vpack.c.b16 %v1861, %v1857
    %v2010 = vpack.c.b16 %v1862, %v1858
    %v2011 = vpack.c.b16 %v1867, %v1863
    %v2012 = vpack.c.b16 %v1868, %v1864
    %v2013 = vpack.c.b16 %v1869, %v1865
    %v2014 = vpack.c.b16 %v1870, %v1866
    %v2015 = vpack.c.b16 %v1875, %v1871
    %v2016 = vpack.c.b16 %v1876, %v1872
    %v2017 = vpack.c.b16 %v1877, %v1873
    %v2018 = vpack.c.b16 %v1878, %v1874
    %v2019 = vpack.c.b16 %v1883, %v1879
    %v2020 = vpack.c.b16 %v1884, %v1880
    %v2021 = vpack.c.b16 %v1885, %v1881
    %v2022 = vpack.c.b16 %v1886, %v1882
    %v2023 = vpack.c.b16 %v1891, %v1887
    %v2024 = vpack.c.b16 %v1892, %v1888
    %v2025 = vpack.c.b16 %v1893, %v1889
    %v2026 = vpack.c.b16 %v1894, %v1890
    %v2027 = vpack.c.b16 %v1899, %v1895
    %v2028 = vpack.c.b16 %v1900, %v1896
    %v2029 = vpack.c.b16 %v1901, %v1897
    %v2030 = vpack.c.b16 %v1902, %v1898
    %2159 = vmatprep.subr.bf16.mxu0 %v1904
    %2160 = vmatpush1.bf16.msra.mxu0 %v1903
    %2161 = vmatprep.subr.bf16.mxu0 %v1908
    %2162 = vmatpush1.bf16.msra.mxu0 %v1907
    %2163 = vmatprep.subr.bf16.mxu0 %v1912
    %2164 = vmatpush1.bf16.msra.mxu0 %v1911
    %2165 = vmatprep.subr.bf16.mxu0 %v1916
    %2166 = vmatpush1.bf16.msra.mxu0 %v1915
    %2167 = vmatprep.subr.bf16.mxu0 %v1920
    %2168 = vmatpush1.bf16.msra.mxu0 %v1919
    %2169 = vmatprep.subr.bf16.mxu0 %v1924
    %2170 = vmatpush1.bf16.msra.mxu0 %v1923
    %2171 = vmatprep.subr.bf16.mxu0 %v1928
    %2172 = vmatpush1.bf16.msra.mxu0 %v1927
    %2173 = vmatprep.subr.bf16.mxu0 %v1932
    %2174 = vmatpush1.bf16.msra.mxu0 %v1931
    %2175 = vmatprep.subr.bf16.mxu0 %v1936
    %2176 = vmatpush1.bf16.msra.mxu0 %v1935
    %2177 = vmatprep.subr.bf16.mxu0 %v1940
    %2178 = vmatpush1.bf16.msra.mxu0 %v1939
    %2179 = vmatprep.subr.bf16.mxu0 %v1944
    %2180 = vmatpush1.bf16.msra.mxu0 %v1943
    %2181 = vmatprep.subr.bf16.mxu0 %v1948
    %2182 = vmatpush1.bf16.msra.mxu0 %v1947
    %2183 = vmatprep.subr.bf16.mxu0 %v1952
    %2184 = vmatpush1.bf16.msra.mxu0 %v1951
    %2185 = vmatprep.subr.bf16.mxu0 %v1956
    %2186 = vmatpush1.bf16.msra.mxu0 %v1955
    %2187 = vmatprep.subr.bf16.mxu0 %v1960
    %2188 = vmatpush1.bf16.msra.mxu0 %v1959
    %2189 = vmatprep.subr.bf16.mxu0 %v1964
    %2190 = vmatpush1.bf16.msra.mxu0 %v1963
    %2191 = vmatprep.mubr.bf16.mxu0 %v1495
    %2192 = vmatmul.mubr.bf16.gmra.mrb[0].mxu0 %v1494
    %v2193 = vpop.f32.mrb[0].mxu0
    %v2194 = vadd.f32 %v1502, %v2193
    %v2195 = vpop.f32.mrb[0].mxu0
    %v2196 = vadd.f32 %v1506, %v2195
    %v2197 = vpop.f32.mrb[0].mxu0
    %v2198 = vadd.f32 %v1502, %v2197
    %v2199 = vpop.f32.mrb[0].mxu0
    %v2200 = vadd.f32 %v1506, %v2199
    %2201 = vdwg.mxu0
    %2202 = vmatprep.subr.bf16.mxu0 %v1968
    %2203 = vmatpush1.bf16.msra.mxu0 %v1967
    %2204 = vmatprep.subr.bf16.mxu0 %v1972
    %2205 = vmatpush1.bf16.msra.mxu0 %v1971
    %2206 = vmatprep.subr.bf16.mxu0 %v1976
    %2207 = vmatpush1.bf16.msra.mxu0 %v1975
    %2208 = vmatprep.subr.bf16.mxu0 %v1980
    %2209 = vmatpush1.bf16.msra.mxu0 %v1979
    %2210 = vmatprep.subr.bf16.mxu0 %v1984
    %2211 = vmatpush1.bf16.msra.mxu0 %v1983
    %2212 = vmatprep.subr.bf16.mxu0 %v1988
    %2213 = vmatpush1.bf16.msra.mxu0 %v1987
    %2214 = vmatprep.subr.bf16.mxu0 %v1992
    %2215 = vmatpush1.bf16.msra.mxu0 %v1991
    %2216 = vmatprep.subr.bf16.mxu0 %v1996
    %2217 = vmatpush1.bf16.msra.mxu0 %v1995
    %2218 = vmatprep.subr.bf16.mxu0 %v2000
    %2219 = vmatpush1.bf16.msra.mxu0 %v1999
    %2220 = vmatprep.subr.bf16.mxu0 %v2004
    %2221 = vmatpush1.bf16.msra.mxu0 %v2003
    %2222 = vmatprep.subr.bf16.mxu0 %v2008
    %2223 = vmatpush1.bf16.msra.mxu0 %v2007
    %2224 = vmatprep.subr.bf16.mxu0 %v2012
    %2225 = vmatpush1.bf16.msra.mxu0 %v2011
    %2226 = vmatprep.subr.bf16.mxu0 %v2016
    %2227 = vmatpush1.bf16.msra.mxu0 %v2015
    %2228 = vmatprep.subr.bf16.mxu0 %v2020
    %2229 = vmatpush1.bf16.msra.mxu0 %v2019
    %2230 = vmatprep.subr.bf16.mxu0 %v2024
    %2231 = vmatpush1.bf16.msra.mxu0 %v2023
    %2232 = vmatprep.subr.bf16.mxu0 %v2028
    %2233 = vmatpush1.bf16.msra.mxu0 %v2027
    %2234 = vmatprep.mubr.bf16.mxu0 %v1497
    %2235 = vmatmul.mubr.bf16.gmra.mrb[0].mxu0 %v1496
    %v2236 = vpop.f32.mrb[0].mxu0
    %v2237 = vadd.f32 %v2194, %v2236
    %v2238 = vpop.f32.mrb[0].mxu0
    %v2239 = vadd.f32 %v2196, %v2238
    %v2240 = vpop.f32.mrb[0].mxu0
    %v2241 = vadd.f32 %v2198, %v2240
    %v2242 = vpop.f32.mrb[0].mxu0
    %v2243 = vadd.f32 %v2200, %v2242
    %2244 = vdwg.mxu0
    %2245 = vmatprep.subr.bf16.mxu0 %v1906
    %2246 = vmatpush1.bf16.msra.mxu0 %v1905
    %2247 = vmatprep.subr.bf16.mxu0 %v1910
    %2248 = vmatpush1.bf16.msra.mxu0 %v1909
    %2249 = vmatprep.subr.bf16.mxu0 %v1914
    %2250 = vmatpush1.bf16.msra.mxu0 %v1913
    %2251 = vmatprep.subr.bf16.mxu0 %v1918
    %2252 = vmatpush1.bf16.msra.mxu0 %v1917
    %2253 = vmatprep.subr.bf16.mxu0 %v1922
    %2254 = vmatpush1.bf16.msra.mxu0 %v1921
    %2255 = vmatprep.subr.bf16.mxu0 %v1926
    %2256 = vmatpush1.bf16.msra.mxu0 %v1925
    %2257 = vmatprep.subr.bf16.mxu0 %v1930
    %2258 = vmatpush1.bf16.msra.mxu0 %v1929
    %2259 = vmatprep.subr.bf16.mxu0 %v1934
    %2260 = vmatpush1.bf16.msra.mxu0 %v1933
    %2261 = vmatprep.subr.bf16.mxu0 %v1938
    %2262 = vmatpush1.bf16.msra.mxu0 %v1937
    %2263 = vmatprep.subr.bf16.mxu0 %v1942
    %2264 = vmatpush1.bf16.msra.mxu0 %v1941
    %2265 = vmatprep.subr.bf16.mxu0 %v1946
    %2266 = vmatpush1.bf16.msra.mxu0 %v1945
    %2267 = vmatprep.subr.bf16.mxu0 %v1950
    %2268 = vmatpush1.bf16.msra.mxu0 %v1949
    %2269 = vmatprep.subr.bf16.mxu0 %v1954
    %2270 = vmatpush1.bf16.msra.mxu0 %v1953
    %2271 = vmatprep.subr.bf16.mxu0 %v1958
    %2272 = vmatpush1.bf16.msra.mxu0 %v1957
    %2273 = vmatprep.subr.bf16.mxu0 %v1962
    %2274 = vmatpush1.bf16.msra.mxu0 %v1961
    %2275 = vmatprep.subr.bf16.mxu0 %v1966
    %2276 = vmatpush1.bf16.msra.mxu0 %v1965
    %2277 = vmatprep.mubr.bf16.mxu0 %v1495
    %2278 = vmatmul.mubr.bf16.gmra.mrb[0].mxu0 %v1494
    %v2279 = vpop.f32.mrb[0].mxu0
    %v2280 = vadd.f32 %v1510, %v2279
    %v2281 = vpop.f32.mrb[0].mxu0
    %v2282 = vadd.f32 %v1514, %v2281
    %v2283 = vpop.f32.mrb[0].mxu0
    %v2284 = vadd.f32 %v1510, %v2283
    %v2285 = vpop.f32.mrb[0].mxu0
    %v2286 = vadd.f32 %v1514, %v2285
    %2287 = vdwg.mxu0
    %2288 = vmatprep.subr.bf16.mxu0 %v1970
    %2289 = vmatpush1.bf16.msra.mxu0 %v1969
    %2290 = vmatprep.subr.bf16.mxu0 %v1974
    %2291 = vmatpush1.bf16.msra.mxu0 %v1973
    %2292 = vmatprep.subr.bf16.mxu0 %v1978
    %2293 = vmatpush1.bf16.msra.mxu0 %v1977
    %2294 = vmatprep.subr.bf16.mxu0 %v1982
    %2295 = vmatpush1.bf16.msra.mxu0 %v1981
    %2296 = vmatprep.subr.bf16.mxu0 %v1986
    %2297 = vmatpush1.bf16.msra.mxu0 %v1985
    %2298 = vmatprep.subr.bf16.mxu0 %v1990
    %2299 = vmatpush1.bf16.msra.mxu0 %v1989
    %2300 = vmatprep.subr.bf16.mxu0 %v1994
    %2301 = vmatpush1.bf16.msra.mxu0 %v1993
    %2302 = vmatprep.subr.bf16.mxu0 %v1998
    %2303 = vmatpush1.bf16.msra.mxu0 %v1997
    %2304 = vmatprep.subr.bf16.mxu0 %v2002
    %2305 = vmatpush1.bf16.msra.mxu0 %v2001
    %2306 = vmatprep.subr.bf16.mxu0 %v2006
    %2307 = vmatpush1.bf16.msra.mxu0 %v2005
    %2308 = vmatprep.subr.bf16.mxu0 %v2010
    %2309 = vmatpush1.bf16.msra.mxu0 %v2009
    %2310 = vmatprep.subr.bf16.mxu0 %v2014
    %2311 = vmatpush1.bf16.msra.mxu0 %v2013
    %2312 = vmatprep.subr.bf16.mxu0 %v2018
    %2313 = vmatpush1.bf16.msra.mxu0 %v2017
    %2314 = vmatprep.subr.bf16.mxu0 %v2022
    %2315 = vmatpush1.bf16.msra.mxu0 %v2021
    %2316 = vmatprep.subr.bf16.mxu0 %v2026
    %2317 = vmatpush1.bf16.msra.mxu0 %v2025
    %2318 = vmatprep.subr.bf16.mxu0 %v2030
    %2319 = vmatpush1.bf16.msra.mxu0 %v2029
    %2320 = vmatprep.mubr.bf16.mxu0 %v1497
    %2321 = vmatmul.mubr.bf16.gmra.mrb[0].mxu0 %v1496
    %v2322 = vpop.f32.mrb[0].mxu0
    %v2323 = vadd.f32 %v2280, %v2322
    %v2324 = vpop.f32.mrb[0].mxu0
    %v2325 = vadd.f32 %v2282, %v2324
    %v2326 = vpop.f32.mrb[0].mxu0
    %v2327 = vadd.f32 %v2284, %v2326
    %v2328 = vpop.f32.mrb[0].mxu0
    %v2329 = vadd.f32 %v2286, %v2328
    %2330 = vdwg.mxu0
    %v2331 = vmax.f32 %v2237, 0.0
    %v2332 = vmax.f32 %v2239, 0.0
    %v2333 = vmax.f32 %v2323, 0.0
    %v2334 = vmax.f32 %v2325, 0.0
    %v2335 = vmax.f32 %v2241, 0.0
    %v2336 = vmax.f32 %v2243, 0.0
    %v2337 = vmax.f32 %v2327, 0.0
    %v2338 = vmax.f32 %v2329, 0.0
    %v2339 = vadd.f32 %v2331, %v1195
    %v2340 = vadd.f32 %v2332, %v1197
    %v2341 = vadd.f32 %v2333, %v1281
    %v2342 = vadd.f32 %v2334, %v1283
    %v2343 = vadd.f32 %v2335, %v1199
    %v2344 = vadd.f32 %v2336, %v1201
    %v2345 = vadd.f32 %v2337, %v1285
    %v2346 = vadd.f32 %v2338, %v1287
    %v2347 = vpack.c.bf16 %v2343, %v2339
    %v2348 = vpack.c.bf16 %v2344, %v2340
    %v2349 = vpack.c.bf16 %v2345, %v2341
    %v2350 = vpack.c.bf16 %v2346, %v2342
    %v2479 = vunpack.c.l.b16 %v219
    %v2480 = vunpack.c.h.b16 %v219
    %v2481 = vunpack.c.l.b16 %v220
    %v2482 = vunpack.c.h.b16 %v220
    %v2483 = vunpack.c.l.b16 %v221
    %v2484 = vunpack.c.h.b16 %v221
    %v2485 = vunpack.c.l.b16 %v222
    %v2486 = vunpack.c.h.b16 %v222
    %v2487 = vunpack.c.l.b16 %v223
    %v2488 = vunpack.c.h.b16 %v223
    %v2489 = vunpack.c.l.b16 %v224
    %v2490 = vunpack.c.h.b16 %v224
    %v2491 = vunpack.c.l.b16 %v225
    %v2492 = vunpack.c.h.b16 %v225
    %v2493 = vunpack.c.l.b16 %v226
    %v2494 = vunpack.c.h.b16 %v226
    %v2495 = vunpack.c.l.b16 %v227
    %v2496 = vunpack.c.h.b16 %v227
    %v2497 = vunpack.c.l.b16 %v228
    %v2498 = vunpack.c.h.b16 %v228
    %v2499 = vunpack.c.l.b16 %v229
    %v2500 = vunpack.c.h.b16 %v229
    %v2501 = vunpack.c.l.b16 %v230
    %v2502 = vunpack.c.h.b16 %v230
    %v2503 = vunpack.c.l.b16 %v231
    %v2504 = vunpack.c.h.b16 %v231
    %v2505 = vunpack.c.l.b16 %v232
    %v2506 = vunpack.c.h.b16 %v232
    %v2507 = vunpack.c.l.b16 %v233
    %v2508 = vunpack.c.h.b16 %v233
    %v2509 = vunpack.c.l.b16 %v234
    %v2510 = vunpack.c.h.b16 %v234
    %v2511 = vunpack.c.l.b16 %v235
    %v2512 = vunpack.c.h.b16 %v235
    %v2513 = vunpack.c.l.b16 %v236
    %v2514 = vunpack.c.h.b16 %v236
    %v2515 = vunpack.c.l.b16 %v237
    %v2516 = vunpack.c.h.b16 %v237
    %v2517 = vunpack.c.l.b16 %v238
    %v2518 = vunpack.c.h.b16 %v238
    %v2519 = vunpack.c.l.b16 %v239
    %v2520 = vunpack.c.h.b16 %v239
    %v2521 = vunpack.c.l.b16 %v240
    %v2522 = vunpack.c.h.b16 %v240
    %v2523 = vunpack.c.l.b16 %v241
    %v2524 = vunpack.c.h.b16 %v241
    %v2525 = vunpack.c.l.b16 %v242
    %v2526 = vunpack.c.h.b16 %v242
    %v2527 = vunpack.c.l.b16 %v243
    %v2528 = vunpack.c.h.b16 %v243
    %v2529 = vunpack.c.l.b16 %v244
    %v2530 = vunpack.c.h.b16 %v244
    %v2531 = vunpack.c.l.b16 %v245
    %v2532 = vunpack.c.h.b16 %v245
    %v2533 = vunpack.c.l.b16 %v246
    %v2534 = vunpack.c.h.b16 %v246
    %v2535 = vunpack.c.l.b16 %v247
    %v2536 = vunpack.c.h.b16 %v247
    %v2537 = vunpack.c.l.b16 %v248
    %v2538 = vunpack.c.h.b16 %v248
    %v2539 = vunpack.c.l.b16 %v249
    %v2540 = vunpack.c.h.b16 %v249
    %v2541 = vunpack.c.l.b16 %v250
    %v2542 = vunpack.c.h.b16 %v250
    %v2543 = vunpack.c.l.b16 %v251
    %v2544 = vunpack.c.h.b16 %v251
    %v2545 = vunpack.c.l.b16 %v252
    %v2546 = vunpack.c.h.b16 %v252
    %v2547 = vunpack.c.l.b16 %v253
    %v2548 = vunpack.c.h.b16 %v253
    %v2549 = vunpack.c.l.b16 %v254
    %v2550 = vunpack.c.h.b16 %v254
    %v2551 = vunpack.c.l.b16 %v255
    %v2552 = vunpack.c.h.b16 %v255
    %v2553 = vunpack.c.l.b16 %v256
    %v2554 = vunpack.c.h.b16 %v256
    %v2555 = vunpack.c.l.b16 %v257
    %v2556 = vunpack.c.h.b16 %v257
    %v2557 = vunpack.c.l.b16 %v258
    %v2558 = vunpack.c.h.b16 %v258
    %v2559 = vunpack.c.l.b16 %v259
    %v2560 = vunpack.c.h.b16 %v259
    %v2561 = vunpack.c.l.b16 %v260
    %v2562 = vunpack.c.h.b16 %v260
    %v2563 = vunpack.c.l.b16 %v261
    %v2564 = vunpack.c.h.b16 %v261
    %v2565 = vunpack.c.l.b16 %v262
    %v2566 = vunpack.c.h.b16 %v262
    %v2567 = vunpack.c.l.b16 %v263
    %v2568 = vunpack.c.h.b16 %v263
    %v2569 = vunpack.c.l.b16 %v264
    %v2570 = vunpack.c.h.b16 %v264
    %v2571 = vunpack.c.l.b16 %v265
    %v2572 = vunpack.c.h.b16 %v265
    %v2573 = vunpack.c.l.b16 %v266
    %v2574 = vunpack.c.h.b16 %v266
    %v2575 = vunpack.c.l.b16 %v267
    %v2576 = vunpack.c.h.b16 %v267
    %v2577 = vunpack.c.l.b16 %v268
    %v2578 = vunpack.c.h.b16 %v268
    %v2579 = vunpack.c.l.b16 %v269
    %v2580 = vunpack.c.h.b16 %v269
    %v2581 = vunpack.c.l.b16 %v270
    %v2582 = vunpack.c.h.b16 %v270
    %v2583 = vunpack.c.l.b16 %v271
    %v2584 = vunpack.c.h.b16 %v271
    %v2585 = vunpack.c.l.b16 %v272
    %v2586 = vunpack.c.h.b16 %v272
    %v2587 = vunpack.c.l.b16 %v273
    %v2588 = vunpack.c.h.b16 %v273
    %v2589 = vunpack.c.l.b16 %v274
    %v2590 = vunpack.c.h.b16 %v274
    %v2591 = vunpack.c.l.b16 %v275
    %v2592 = vunpack.c.h.b16 %v275
    %v2593 = vunpack.c.l.b16 %v276
    %v2594 = vunpack.c.h.b16 %v276
    %v2595 = vunpack.c.l.b16 %v277
    %v2596 = vunpack.c.h.b16 %v277
    %v2597 = vunpack.c.l.b16 %v278
    %v2598 = vunpack.c.h.b16 %v278
    %v2599 = vunpack.c.l.b16 %v279
    %v2600 = vunpack.c.h.b16 %v279
    %v2601 = vunpack.c.l.b16 %v280
    %v2602 = vunpack.c.h.b16 %v280
    %v2603 = vunpack.c.l.b16 %v281
    %v2604 = vunpack.c.h.b16 %v281
    %v2605 = vunpack.c.l.b16 %v282
    %v2606 = vunpack.c.h.b16 %v282
    %v2607 = vunpack.c.l.b16 %v283
    %v2608 = vunpack.c.h.b16 %v283
    %v2609 = vunpack.c.l.b16 %v284
    %v2610 = vunpack.c.h.b16 %v284
    %v2611 = vunpack.c.l.b16 %v285
    %v2612 = vunpack.c.h.b16 %v285
    %v2613 = vunpack.c.l.b16 %v286
    %v2614 = vunpack.c.h.b16 %v286
    %v2615 = vunpack.c.l.b16 %v287
    %v2616 = vunpack.c.h.b16 %v287
    %v2617 = vunpack.c.l.b16 %v288
    %v2618 = vunpack.c.h.b16 %v288
    %v2619 = vunpack.c.l.b16 %v289
    %v2620 = vunpack.c.h.b16 %v289
    %v2621 = vunpack.c.l.b16 %v290
    %v2622 = vunpack.c.h.b16 %v290
    %v2623 = vunpack.c.l.b16 %v291
    %v2624 = vunpack.c.h.b16 %v291
    %v2625 = vunpack.c.l.b16 %v292
    %v2626 = vunpack.c.h.b16 %v292
    %v2627 = vunpack.c.l.b16 %v293
    %v2628 = vunpack.c.h.b16 %v293
    %v2629 = vunpack.c.l.b16 %v294
    %v2630 = vunpack.c.h.b16 %v294
    %v2631 = vunpack.c.l.b16 %v295
    %v2632 = vunpack.c.h.b16 %v295
    %v2633 = vunpack.c.l.b16 %v296
    %v2634 = vunpack.c.h.b16 %v296
    %v2635 = vunpack.c.l.b16 %v297
    %v2636 = vunpack.c.h.b16 %v297
    %v2637 = vunpack.c.l.b16 %v298
    %v2638 = vunpack.c.h.b16 %v298
    %v2639 = vunpack.c.l.b16 %v299
    %v2640 = vunpack.c.h.b16 %v299
    %v2641 = vunpack.c.l.b16 %v300
    %v2642 = vunpack.c.h.b16 %v300
    %v2643 = vunpack.c.l.b16 %v301
    %v2644 = vunpack.c.h.b16 %v301
    %v2645 = vunpack.c.l.b16 %v302
    %v2646 = vunpack.c.h.b16 %v302
    %v2647 = vunpack.c.l.b16 %v303
    %v2648 = vunpack.c.h.b16 %v303
    %v2649 = vunpack.c.l.b16 %v304
    %v2650 = vunpack.c.h.b16 %v304
    %v2651 = vunpack.c.l.b16 %v305
    %v2652 = vunpack.c.h.b16 %v305
    %v2653 = vunpack.c.l.b16 %v306
    %v2654 = vunpack.c.h.b16 %v306
    %v2655 = vunpack.c.l.b16 %v307
    %v2656 = vunpack.c.h.b16 %v307
    %v2657 = vunpack.c.l.b16 %v308
    %v2658 = vunpack.c.h.b16 %v308
    %v2659 = vunpack.c.l.b16 %v309
    %v2660 = vunpack.c.h.b16 %v309
    %v2661 = vunpack.c.l.b16 %v310
    %v2662 = vunpack.c.h.b16 %v310
    %v2663 = vunpack.c.l.b16 %v311
    %v2664 = vunpack.c.h.b16 %v311
    %v2665 = vunpack.c.l.b16 %v312
    %v2666 = vunpack.c.h.b16 %v312
    %v2667 = vunpack.c.l.b16 %v313
    %v2668 = vunpack.c.h.b16 %v313
    %v2669 = vunpack.c.l.b16 %v314
    %v2670 = vunpack.c.h.b16 %v314
    %v2671 = vunpack.c.l.b16 %v315
    %v2672 = vunpack.c.h.b16 %v315
    %v2673 = vunpack.c.l.b16 %v316
    %v2674 = vunpack.c.h.b16 %v316
    %v2675 = vunpack.c.l.b16 %v317
    %v2676 = vunpack.c.h.b16 %v317
    %v2677 = vunpack.c.l.b16 %v318
    %v2678 = vunpack.c.h.b16 %v318
    %v2679 = vunpack.c.l.b16 %v319
    %v2680 = vunpack.c.h.b16 %v319
    %v2681 = vunpack.c.l.b16 %v320
    %v2682 = vunpack.c.h.b16 %v320
    %v2683 = vunpack.c.l.b16 %v321
    %v2684 = vunpack.c.h.b16 %v321
    %v2685 = vunpack.c.l.b16 %v322
    %v2686 = vunpack.c.h.b16 %v322
    %v2687 = vunpack.c.l.b16 %v323
    %v2688 = vunpack.c.h.b16 %v323
    %v2689 = vunpack.c.l.b16 %v324
    %v2690 = vunpack.c.h.b16 %v324
    %v2691 = vunpack.c.l.b16 %v325
    %v2692 = vunpack.c.h.b16 %v325
    %v2693 = vunpack.c.l.b16 %v326
    %v2694 = vunpack.c.h.b16 %v326
    %v2695 = vunpack.c.l.b16 %v327
    %v2696 = vunpack.c.h.b16 %v327
    %v2697 = vunpack.c.l.b16 %v328
    %v2698 = vunpack.c.h.b16 %v328
    %v2699 = vunpack.c.l.b16 %v329
    %v2700 = vunpack.c.h.b16 %v329
    %v2701 = vunpack.c.l.b16 %v330
    %v2702 = vunpack.c.h.b16 %v330
    %v2703 = vunpack.c.l.b16 %v331
    %v2704 = vunpack.c.h.b16 %v331
    %v2705 = vunpack.c.l.b16 %v332
    %v2706 = vunpack.c.h.b16 %v332
    %v2707 = vunpack.c.l.b16 %v333
    %v2708 = vunpack.c.h.b16 %v333
    %v2709 = vunpack.c.l.b16 %v334
    %v2710 = vunpack.c.h.b16 %v334
    %v2711 = vunpack.c.l.b16 %v335
    %v2712 = vunpack.c.h.b16 %v335
    %v2713 = vunpack.c.l.b16 %v336
    %v2714 = vunpack.c.h.b16 %v336
    %v2715 = vunpack.c.l.b16 %v337
    %v2716 = vunpack.c.h.b16 %v337
    %v2717 = vunpack.c.l.b16 %v338
    %v2718 = vunpack.c.h.b16 %v338
    %v2719 = vunpack.c.l.b16 %v339
    %v2720 = vunpack.c.h.b16 %v339
    %v2721 = vunpack.c.l.b16 %v340
    %v2722 = vunpack.c.h.b16 %v340
    %v2723 = vunpack.c.l.b16 %v341
    %v2724 = vunpack.c.h.b16 %v341
    %v2725 = vunpack.c.l.b16 %v342
    %v2726 = vunpack.c.h.b16 %v342
    %v2727 = vunpack.c.l.b16 %v343
    %v2728 = vunpack.c.h.b16 %v343
    %v2729 = vunpack.c.l.b16 %v344
    %v2730 = vunpack.c.h.b16 %v344
    %v2731 = vunpack.c.l.b16 %v345
    %v2732 = vunpack.c.h.b16 %v345
    %v2733 = vunpack.c.l.b16 %v346
    %v2734 = vunpack.c.h.b16 %v346
    %v2735 = vpack.c.b16 %v2483, %v2479
    %v2736 = vpack.c.b16 %v2484, %v2480
    %v2737 = vpack.c.b16 %v2485, %v2481
    %v2738 = vpack.c.b16 %v2486, %v2482
    %v2739 = vpack.c.b16 %v2491, %v2487
    %v2740 = vpack.c.b16 %v2492, %v2488
    %v2741 = vpack.c.b16 %v2493, %v2489
    %v2742 = vpack.c.b16 %v2494, %v2490
    %v2743 = vpack.c.b16 %v2499, %v2495
    %v2744 = vpack.c.b16 %v2500, %v2496
    %v2745 = vpack.c.b16 %v2501, %v2497
    %v2746 = vpack.c.b16 %v2502, %v2498
    %v2747 = vpack.c.b16 %v2507, %v2503
    %v2748 = vpack.c.b16 %v2508, %v2504
    %v2749 = vpack.c.b16 %v2509, %v2505
    %v2750 = vpack.c.b16 %v2510, %v2506
    %v2751 = vpack.c.b16 %v2515, %v2511
    %v2752 = vpack.c.b16 %v2516, %v2512
    %v2753 = vpack.c.b16 %v2517, %v2513
    %v2754 = vpack.c.b16 %v2518, %v2514
    %v2755 = vpack.c.b16 %v2523, %v2519
    %v2756 = vpack.c.b16 %v2524, %v2520
    %v2757 = vpack.c.b16 %v2525, %v2521
    %v2758 = vpack.c.b16 %v2526, %v2522
    %v2759 = vpack.c.b16 %v2531, %v2527
    %v2760 = vpack.c.b16 %v2532, %v2528
    %v2761 = vpack.c.b16 %v2533, %v2529
    %v2762 = vpack.c.b16 %v2534, %v2530
    %v2763 = vpack.c.b16 %v2539, %v2535
    %v2764 = vpack.c.b16 %v2540, %v2536
    %v2765 = vpack.c.b16 %v2541, %v2537
    %v2766 = vpack.c.b16 %v2542, %v2538
    %v2767 = vpack.c.b16 %v2547, %v2543
    %v2768 = vpack.c.b16 %v2548, %v2544
    %v2769 = vpack.c.b16 %v2549, %v2545
    %v2770 = vpack.c.b16 %v2550, %v2546
    %v2771 = vpack.c.b16 %v2555, %v2551
    %v2772 = vpack.c.b16 %v2556, %v2552
    %v2773 = vpack.c.b16 %v2557, %v2553
    %v2774 = vpack.c.b16 %v2558, %v2554
    %v2775 = vpack.c.b16 %v2563, %v2559
    %v2776 = vpack.c.b16 %v2564, %v2560
    %v2777 = vpack.c.b16 %v2565, %v2561
    %v2778 = vpack.c.b16 %v2566, %v2562
    %v2779 = vpack.c.b16 %v2571, %v2567
    %v2780 = vpack.c.b16 %v2572, %v2568
    %v2781 = vpack.c.b16 %v2573, %v2569
    %v2782 = vpack.c.b16 %v2574, %v2570
    %v2783 = vpack.c.b16 %v2579, %v2575
    %v2784 = vpack.c.b16 %v2580, %v2576
    %v2785 = vpack.c.b16 %v2581, %v2577
    %v2786 = vpack.c.b16 %v2582, %v2578
    %v2787 = vpack.c.b16 %v2587, %v2583
    %v2788 = vpack.c.b16 %v2588, %v2584
    %v2789 = vpack.c.b16 %v2589, %v2585
    %v2790 = vpack.c.b16 %v2590, %v2586
    %v2791 = vpack.c.b16 %v2595, %v2591
    %v2792 = vpack.c.b16 %v2596, %v2592
    %v2793 = vpack.c.b16 %v2597, %v2593
    %v2794 = vpack.c.b16 %v2598, %v2594
    %v2795 = vpack.c.b16 %v2603, %v2599
    %v2796 = vpack.c.b16 %v2604, %v2600
    %v2797 = vpack.c.b16 %v2605, %v2601
    %v2798 = vpack.c.b16 %v2606, %v2602
    %v2799 = vpack.c.b16 %v2611, %v2607
    %v2800 = vpack.c.b16 %v2612, %v2608
    %v2801 = vpack.c.b16 %v2613, %v2609
    %v2802 = vpack.c.b16 %v2614, %v2610
    %v2803 = vpack.c.b16 %v2619, %v2615
    %v2804 = vpack.c.b16 %v2620, %v2616
    %v2805 = vpack.c.b16 %v2621, %v2617
    %v2806 = vpack.c.b16 %v2622, %v2618
    %v2807 = vpack.c.b16 %v2627, %v2623
    %v2808 = vpack.c.b16 %v2628, %v2624
    %v2809 = vpack.c.b16 %v2629, %v2625
    %v2810 = vpack.c.b16 %v2630, %v2626
    %v2811 = vpack.c.b16 %v2635, %v2631
    %v2812 = vpack.c.b16 %v2636, %v2632
    %v2813 = vpack.c.b16 %v2637, %v2633
    %v2814 = vpack.c.b16 %v2638, %v2634
    %v2815 = vpack.c.b16 %v2643, %v2639
    %v2816 = vpack.c.b16 %v2644, %v2640
    %v2817 = vpack.c.b16 %v2645, %v2641
    %v2818 = vpack.c.b16 %v2646, %v2642
    %v2819 = vpack.c.b16 %v2651, %v2647
    %v2820 = vpack.c.b16 %v2652, %v2648
    %v2821 = vpack.c.b16 %v2653, %v2649
    %v2822 = vpack.c.b16 %v2654, %v2650
    %v2823 = vpack.c.b16 %v2659, %v2655
    %v2824 = vpack.c.b16 %v2660, %v2656
    %v2825 = vpack.c.b16 %v2661, %v2657
    %v2826 = vpack.c.b16 %v2662, %v2658
    %v2827 = vpack.c.b16 %v2667, %v2663
    %v2828 = vpack.c.b16 %v2668, %v2664
    %v2829 = vpack.c.b16 %v2669, %v2665
    %v2830 = vpack.c.b16 %v2670, %v2666
    %v2831 = vpack.c.b16 %v2675, %v2671
    %v2832 = vpack.c.b16 %v2676, %v2672
    %v2833 = vpack.c.b16 %v2677, %v2673
    %v2834 = vpack.c.b16 %v2678, %v2674
    %v2835 = vpack.c.b16 %v2683, %v2679
    %v2836 = vpack.c.b16 %v2684, %v2680
    %v2837 = vpack.c.b16 %v2685, %v2681
    %v2838 = vpack.c.b16 %v2686, %v2682
    %v2839 = vpack.c.b16 %v2691, %v2687
    %v2840 = vpack.c.b16 %v2692, %v2688
    %v2841 = vpack.c.b16 %v2693, %v2689
    %v2842 = vpack.c.b16 %v2694, %v2690
    %v2843 = vpack.c.b16 %v2699, %v2695
    %v2844 = vpack.c.b16 %v2700, %v2696
    %v2845 = vpack.c.b16 %v2701, %v2697
    %v2846 = vpack.c.b16 %v2702, %v2698
    %v2847 = vpack.c.b16 %v2707, %v2703
    %v2848 = vpack.c.b16 %v2708, %v2704
    %v2849 = vpack.c.b16 %v2709, %v2705
    %v2850 = vpack.c.b16 %v2710, %v2706
    %v2851 = vpack.c.b16 %v2715, %v2711
    %v2852 = vpack.c.b16 %v2716, %v2712
    %v2853 = vpack.c.b16 %v2717, %v2713
    %v2854 = vpack.c.b16 %v2718, %v2714
    %v2855 = vpack.c.b16 %v2723, %v2719
    %v2856 = vpack.c.b16 %v2724, %v2720
    %v2857 = vpack.c.b16 %v2725, %v2721
    %v2858 = vpack.c.b16 %v2726, %v2722
    %v2859 = vpack.c.b16 %v2731, %v2727
    %v2860 = vpack.c.b16 %v2732, %v2728
    %v2861 = vpack.c.b16 %v2733, %v2729
    %v2862 = vpack.c.b16 %v2734, %v2730
    %2991 = vmatprep.subr.bf16.mxu0 %v2736
    %2992 = vmatpush1.bf16.msra.mxu0 %v2735
    %2993 = vmatprep.subr.bf16.mxu0 %v2740
    %2994 = vmatpush1.bf16.msra.mxu0 %v2739
    %2995 = vmatprep.subr.bf16.mxu0 %v2744
    %2996 = vmatpush1.bf16.msra.mxu0 %v2743
    %2997 = vmatprep.subr.bf16.mxu0 %v2748
    %2998 = vmatpush1.bf16.msra.mxu0 %v2747
    %2999 = vmatprep.subr.bf16.mxu0 %v2752
    %3000 = vmatpush1.bf16.msra.mxu0 %v2751
    %3001 = vmatprep.subr.bf16.mxu0 %v2756
    %3002 = vmatpush1.bf16.msra.mxu0 %v2755
    %3003 = vmatprep.subr.bf16.mxu0 %v2760
    %3004 = vmatpush1.bf16.msra.mxu0 %v2759
    %3005 = vmatprep.subr.bf16.mxu0 %v2764
    %3006 = vmatpush1.bf16.msra.mxu0 %v2763
    %3007 = vmatprep.subr.bf16.mxu0 %v2768
    %3008 = vmatpush1.bf16.msra.mxu0 %v2767
    %3009 = vmatprep.subr.bf16.mxu0 %v2772
    %3010 = vmatpush1.bf16.msra.mxu0 %v2771
    %3011 = vmatprep.subr.bf16.mxu0 %v2776
    %3012 = vmatpush1.bf16.msra.mxu0 %v2775
    %3013 = vmatprep.subr.bf16.mxu0 %v2780
    %3014 = vmatpush1.bf16.msra.mxu0 %v2779
    %3015 = vmatprep.subr.bf16.mxu0 %v2784
    %3016 = vmatpush1.bf16.msra.mxu0 %v2783
    %3017 = vmatprep.subr.bf16.mxu0 %v2788
    %3018 = vmatpush1.bf16.msra.mxu0 %v2787
    %3019 = vmatprep.subr.bf16.mxu0 %v2792
    %3020 = vmatpush1.bf16.msra.mxu0 %v2791
    %3021 = vmatprep.subr.bf16.mxu0 %v2796
    %3022 = vmatpush1.bf16.msra.mxu0 %v2795
    %3023 = vmatprep.mubr.bf16.mxu0 %v2348
    %3024 = vmatmul.mubr.bf16.gmra.mrb[0].mxu0 %v2347
    %v3025 = vpop.f32.mrb[0].mxu0
    %v3026 = vadd.f32 0.0, %v3025
    %v3027 = vpop.f32.mrb[0].mxu0
    %v3028 = vadd.f32 0.0, %v3027
    %v3029 = vpop.f32.mrb[0].mxu0
    %v3030 = vadd.f32 0.0, %v3029
    %v3031 = vpop.f32.mrb[0].mxu0
    %v3032 = vadd.f32 0.0, %v3031
    %3033 = vdwg.mxu0
    %3034 = vmatprep.subr.bf16.mxu0 %v2800
    %3035 = vmatpush1.bf16.msra.mxu0 %v2799
    %3036 = vmatprep.subr.bf16.mxu0 %v2804
    %3037 = vmatpush1.bf16.msra.mxu0 %v2803
    %3038 = vmatprep.subr.bf16.mxu0 %v2808
    %3039 = vmatpush1.bf16.msra.mxu0 %v2807
    %3040 = vmatprep.subr.bf16.mxu0 %v2812
    %3041 = vmatpush1.bf16.msra.mxu0 %v2811
    %3042 = vmatprep.subr.bf16.mxu0 %v2816
    %3043 = vmatpush1.bf16.msra.mxu0 %v2815
    %3044 = vmatprep.subr.bf16.mxu0 %v2820
    %3045 = vmatpush1.bf16.msra.mxu0 %v2819
    %3046 = vmatprep.subr.bf16.mxu0 %v2824
    %3047 = vmatpush1.bf16.msra.mxu0 %v2823
    %3048 = vmatprep.subr.bf16.mxu0 %v2828
    %3049 = vmatpush1.bf16.msra.mxu0 %v2827
    %3050 = vmatprep.subr.bf16.mxu0 %v2832
    %3051 = vmatpush1.bf16.msra.mxu0 %v2831
    %3052 = vmatprep.subr.bf16.mxu0 %v2836
    %3053 = vmatpush1.bf16.msra.mxu0 %v2835
    %3054 = vmatprep.subr.bf16.mxu0 %v2840
    %3055 = vmatpush1.bf16.msra.mxu0 %v2839
    %3056 = vmatprep.subr.bf16.mxu0 %v2844
    %3057 = vmatpush1.bf16.msra.mxu0 %v2843
    %3058 = vmatprep.subr.bf16.mxu0 %v2848
    %3059 = vmatpush1.bf16.msra.mxu0 %v2847
    %3060 = vmatprep.subr.bf16.mxu0 %v2852
    %3061 = vmatpush1.bf16.msra.mxu0 %v2851
    %3062 = vmatprep.subr.bf16.mxu0 %v2856
    %3063 = vmatpush1.bf16.msra.mxu0 %v2855
    %3064 = vmatprep.subr.bf16.mxu0 %v2860
    %3065 = vmatpush1.bf16.msra.mxu0 %v2859
    %3066 = vmatprep.mubr.bf16.mxu0 %v2350
    %3067 = vmatmul.mubr.bf16.gmra.mrb[0].mxu0 %v2349
    %v3068 = vpop.f32.mrb[0].mxu0
    %v3069 = vadd.f32 %v3026, %v3068
    %v3070 = vpop.f32.mrb[0].mxu0
    %v3071 = vadd.f32 %v3028, %v3070
    %v3072 = vpop.f32.mrb[0].mxu0
    %v3073 = vadd.f32 %v3030, %v3072
    %v3074 = vpop.f32.mrb[0].mxu0
    %v3075 = vadd.f32 %v3032, %v3074
    %3076 = vdwg.mxu0
    %3077 = vmatprep.subr.bf16.mxu0 %v2738
    %3078 = vmatpush1.bf16.msra.mxu0 %v2737
    %3079 = vmatprep.subr.bf16.mxu0 %v2742
    %3080 = vmatpush1.bf16.msra.mxu0 %v2741
    %3081 = vmatprep.subr.bf16.mxu0 %v2746
    %3082 = vmatpush1.bf16.msra.mxu0 %v2745
    %3083 = vmatprep.subr.bf16.mxu0 %v2750
    %3084 = vmatpush1.bf16.msra.mxu0 %v2749
    %3085 = vmatprep.subr.bf16.mxu0 %v2754
    %3086 = vmatpush1.bf16.msra.mxu0 %v2753
    %3087 = vmatprep.subr.bf16.mxu0 %v2758
    %3088 = vmatpush1.bf16.msra.mxu0 %v2757
    %3089 = vmatprep.subr.bf16.mxu0 %v2762
    %3090 = vmatpush1.bf16.msra.mxu0 %v2761
    %3091 = vmatprep.subr.bf16.mxu0 %v2766
    %3092 = vmatpush1.bf16.msra.mxu0 %v2765
    %3093 = vmatprep.subr.bf16.mxu0 %v2770
    %3094 = vmatpush1.bf16.msra.mxu0 %v2769
    %3095 = vmatprep.subr.bf16.mxu0 %v2774
    %3096 = vmatpush1.bf16.msra.mxu0 %v2773
    %3097 = vmatprep.subr.bf16.mxu0 %v2778
    %3098 = vmatpush1.bf16.msra.mxu0 %v2777
    %3099 = vmatprep.subr.bf16.mxu0 %v2782
    %3100 = vmatpush1.bf16.msra.mxu0 %v2781
    %3101 = vmatprep.subr.bf16.mxu0 %v2786
    %3102 = vmatpush1.bf16.msra.mxu0 %v2785
    %3103 = vmatprep.subr.bf16.mxu0 %v2790
    %3104 = vmatpush1.bf16.msra.mxu0 %v2789
    %3105 = vmatprep.subr.bf16.mxu0 %v2794
    %3106 = vmatpush1.bf16.msra.mxu0 %v2793
    %3107 = vmatprep.subr.bf16.mxu0 %v2798
    %3108 = vmatpush1.bf16.msra.mxu0 %v2797
    %3109 = vmatprep.mubr.bf16.mxu0 %v2348
    %3110 = vmatmul.mubr.bf16.gmra.mrb[0].mxu0 %v2347
    %v3111 = vpop.f32.mrb[0].mxu0
    %v3112 = vadd.f32 0.0, %v3111
    %v3113 = vpop.f32.mrb[0].mxu0
    %v3114 = vadd.f32 0.0, %v3113
    %v3115 = vpop.f32.mrb[0].mxu0
    %v3116 = vadd.f32 0.0, %v3115
    %v3117 = vpop.f32.mrb[0].mxu0
    %v3118 = vadd.f32 0.0, %v3117
    %3119 = vdwg.mxu0
    %3120 = vmatprep.subr.bf16.mxu0 %v2802
    %3121 = vmatpush1.bf16.msra.mxu0 %v2801
    %3122 = vmatprep.subr.bf16.mxu0 %v2806
    %3123 = vmatpush1.bf16.msra.mxu0 %v2805
    %3124 = vmatprep.subr.bf16.mxu0 %v2810
    %3125 = vmatpush1.bf16.msra.mxu0 %v2809
    %3126 = vmatprep.subr.bf16.mxu0 %v2814
    %3127 = vmatpush1.bf16.msra.mxu0 %v2813
    %3128 = vmatprep.subr.bf16.mxu0 %v2818
    %3129 = vmatpush1.bf16.msra.mxu0 %v2817
    %3130 = vmatprep.subr.bf16.mxu0 %v2822
    %3131 = vmatpush1.bf16.msra.mxu0 %v2821
    %3132 = vmatprep.subr.bf16.mxu0 %v2826
    %3133 = vmatpush1.bf16.msra.mxu0 %v2825
    %3134 = vmatprep.subr.bf16.mxu0 %v2830
    %3135 = vmatpush1.bf16.msra.mxu0 %v2829
    %3136 = vmatprep.subr.bf16.mxu0 %v2834
    %3137 = vmatpush1.bf16.msra.mxu0 %v2833
    %3138 = vmatprep.subr.bf16.mxu0 %v2838
    %3139 = vmatpush1.bf16.msra.mxu0 %v2837
    %3140 = vmatprep.subr.bf16.mxu0 %v2842
    %3141 = vmatpush1.bf16.msra.mxu0 %v2841
    %3142 = vmatprep.subr.bf16.mxu0 %v2846
    %3143 = vmatpush1.bf16.msra.mxu0 %v2845
    %3144 = vmatprep.subr.bf16.mxu0 %v2850
    %3145 = vmatpush1.bf16.msra.mxu0 %v2849
    %3146 = vmatprep.subr.bf16.mxu0 %v2854
    %3147 = vmatpush1.bf16.msra.mxu0 %v2853
    %3148 = vmatprep.subr.bf16.mxu0 %v2858
    %3149 = vmatpush1.bf16.msra.mxu0 %v2857
    %3150 = vmatprep.subr.bf16.mxu0 %v2862
    %3151 = vmatpush1.bf16.msra.mxu0 %v2861
    %3152 = vmatprep.mubr.bf16.mxu0 %v2350
    %3153 = vmatmul.mubr.bf16.gmra.mrb[0].mxu0 %v2349
    %v3154 = vpop.f32.mrb[0].mxu0
    %v3155 = vadd.f32 %v3112, %v3154
    %v3156 = vpop.f32.mrb[0].mxu0
    %v3157 = vadd.f32 %v3114, %v3156
    %v3158 = vpop.f32.mrb[0].mxu0
    %v3159 = vadd.f32 %v3116, %v3158
    %v3160 = vpop.f32.mrb[0].mxu0
    %v3161 = vadd.f32 %v3118, %v3160
    %3162 = vdwg.mxu0
    %v3163 = vpack.c.bf16 %v3073, %v3069
    %v3164 = vpack.c.bf16 %v3075, %v3071
    %v3165 = vpack.c.bf16 %v3159, %v3155
    %v3166 = vpack.c.bf16 %v3161, %v3157
    %3167 = vmatprep.subr.bf16.mxu0 %v1904
    %3168 = vmatpush1.bf16.msra.mxu0 %v1903
    %3169 = vmatprep.subr.bf16.mxu0 %v1908
    %3170 = vmatpush1.bf16.msra.mxu0 %v1907
    %3171 = vmatprep.subr.bf16.mxu0 %v1912
    %3172 = vmatpush1.bf16.msra.mxu0 %v1911
    %3173 = vmatprep.subr.bf16.mxu0 %v1916
    %3174 = vmatpush1.bf16.msra.mxu0 %v1915
    %3175 = vmatprep.subr.bf16.mxu0 %v1920
    %3176 = vmatpush1.bf16.msra.mxu0 %v1919
    %3177 = vmatprep.subr.bf16.mxu0 %v1924
    %3178 = vmatpush1.bf16.msra.mxu0 %v1923
    %3179 = vmatprep.subr.bf16.mxu0 %v1928
    %3180 = vmatpush1.bf16.msra.mxu0 %v1927
    %3181 = vmatprep.subr.bf16.mxu0 %v1932
    %3182 = vmatpush1.bf16.msra.mxu0 %v1931
    %3183 = vmatprep.subr.bf16.mxu0 %v1936
    %3184 = vmatpush1.bf16.msra.mxu0 %v1935
    %3185 = vmatprep.subr.bf16.mxu0 %v1940
    %3186 = vmatpush1.bf16.msra.mxu0 %v1939
    %3187 = vmatprep.subr.bf16.mxu0 %v1944
    %3188 = vmatpush1.bf16.msra.mxu0 %v1943
    %3189 = vmatprep.subr.bf16.mxu0 %v1948
    %3190 = vmatpush1.bf16.msra.mxu0 %v1947
    %3191 = vmatprep.subr.bf16.mxu0 %v1952
    %3192 = vmatpush1.bf16.msra.mxu0 %v1951
    %3193 = vmatprep.subr.bf16.mxu0 %v1956
    %3194 = vmatpush1.bf16.msra.mxu0 %v1955
    %3195 = vmatprep.subr.bf16.mxu0 %v1960
    %3196 = vmatpush1.bf16.msra.mxu0 %v1959
    %3197 = vmatprep.subr.bf16.mxu0 %v1964
    %3198 = vmatpush1.bf16.msra.mxu0 %v1963
    %3199 = vmatprep.mubr.bf16.mxu0 %v3164
    %3200 = vmatmul.mubr.bf16.gmra.mrb[0].mxu0 %v3163
    %v3201 = vpop.f32.mrb[0].mxu0
    %v3202 = vadd.f32 %v1502, %v3201
    %v3203 = vpop.f32.mrb[0].mxu0
    %v3204 = vadd.f32 %v1506, %v3203
    %v3205 = vpop.f32.mrb[0].mxu0
    %v3206 = vadd.f32 %v1502, %v3205
    %v3207 = vpop.f32.mrb[0].mxu0
    %v3208 = vadd.f32 %v1506, %v3207
    %3209 = vdwg.mxu0
    %3210 = vmatprep.subr.bf16.mxu0 %v1968
    %3211 = vmatpush1.bf16.msra.mxu0 %v1967
    %3212 = vmatprep.subr.bf16.mxu0 %v1972
    %3213 = vmatpush1.bf16.msra.mxu0 %v1971
    %3214 = vmatprep.subr.bf16.mxu0 %v1976
    %3215 = vmatpush1.bf16.msra.mxu0 %v1975
    %3216 = vmatprep.subr.bf16.mxu0 %v1980
    %3217 = vmatpush1.bf16.msra.mxu0 %v1979
    %3218 = vmatprep.subr.bf16.mxu0 %v1984
    %3219 = vmatpush1.bf16.msra.mxu0 %v1983
    %3220 = vmatprep.subr.bf16.mxu0 %v1988
    %3221 = vmatpush1.bf16.msra.mxu0 %v1987
    %3222 = vmatprep.subr.bf16.mxu0 %v1992
    %3223 = vmatpush1.bf16.msra.mxu0 %v1991
    %3224 = vmatprep.subr.bf16.mxu0 %v1996
    %3225 = vmatpush1.bf16.msra.mxu0 %v1995
    %3226 = vmatprep.subr.bf16.mxu0 %v2000
    %3227 = vmatpush1.bf16.msra.mxu0 %v1999
    %3228 = vmatprep.subr.bf16.mxu0 %v2004
    %3229 = vmatpush1.bf16.msra.mxu0 %v2003
    %3230 = vmatprep.subr.bf16.mxu0 %v2008
    %3231 = vmatpush1.bf16.msra.mxu0 %v2007
    %3232 = vmatprep.subr.bf16.mxu0 %v2012
    %3233 = vmatpush1.bf16.msra.mxu0 %v2011
    %3234 = vmatprep.subr.bf16.mxu0 %v2016
    %3235 = vmatpush1.bf16.msra.mxu0 %v2015
    %3236 = vmatprep.subr.bf16.mxu0 %v2020
    %3237 = vmatpush1.bf16.msra.mxu0 %v2019
    %3238 = vmatprep.subr.bf16.mxu0 %v2024
    %3239 = vmatpush1.bf16.msra.mxu0 %v2023
    %3240 = vmatprep.subr.bf16.mxu0 %v2028
    %3241 = vmatpush1.bf16.msra.mxu0 %v2027
    %3242 = vmatprep.mubr.bf16.mxu0 %v3166
    %3243 = vmatmul.mubr.bf16.gmra.mrb[0].mxu0 %v3165
    %v3244 = vpop.f32.mrb[0].mxu0
    %v3245 = vadd.f32 %v3202, %v3244
    %v3246 = vpop.f32.mrb[0].mxu0
    %v3247 = vadd.f32 %v3204, %v3246
    %v3248 = vpop.f32.mrb[0].mxu0
    %v3249 = vadd.f32 %v3206, %v3248
    %v3250 = vpop.f32.mrb[0].mxu0
    %v3251 = vadd.f32 %v3208, %v3250
    %3252 = vdwg.mxu0
    %3253 = vmatprep.subr.bf16.mxu0 %v1906
    %3254 = vmatpush1.bf16.msra.mxu0 %v1905
    %3255 = vmatprep.subr.bf16.mxu0 %v1910
    %3256 = vmatpush1.bf16.msra.mxu0 %v1909
    %3257 = vmatprep.subr.bf16.mxu0 %v1914
    %3258 = vmatpush1.bf16.msra.mxu0 %v1913
    %3259 = vmatprep.subr.bf16.mxu0 %v1918
    %3260 = vmatpush1.bf16.msra.mxu0 %v1917
    %3261 = vmatprep.subr.bf16.mxu0 %v1922
    %3262 = vmatpush1.bf16.msra.mxu0 %v1921
    %3263 = vmatprep.subr.bf16.mxu0 %v1926
    %3264 = vmatpush1.bf16.msra.mxu0 %v1925
    %3265 = vmatprep.subr.bf16.mxu0 %v1930
    %3266 = vmatpush1.bf16.msra.mxu0 %v1929
    %3267 = vmatprep.subr.bf16.mxu0 %v1934
    %3268 = vmatpush1.bf16.msra.mxu0 %v1933
    %3269 = vmatprep.subr.bf16.mxu0 %v1938
    %3270 = vmatpush1.bf16.msra.mxu0 %v1937
    %3271 = vmatprep.subr.bf16.mxu0 %v1942
    %3272 = vmatpush1.bf16.msra.mxu0 %v1941
    %3273 = vmatprep.subr.bf16.mxu0 %v1946
    %3274 = vmatpush1.bf16.msra.mxu0 %v1945
    %3275 = vmatprep.subr.bf16.mxu0 %v1950
    %3276 = vmatpush1.bf16.msra.mxu0 %v1949
    %3277 = vmatprep.subr.bf16.mxu0 %v1954
    %3278 = vmatpush1.bf16.msra.mxu0 %v1953
    %3279 = vmatprep.subr.bf16.mxu0 %v1958
    %3280 = vmatpush1.bf16.msra.mxu0 %v1957
    %3281 = vmatprep.subr.bf16.mxu0 %v1962
    %3282 = vmatpush1.bf16.msra.mxu0 %v1961
    %3283 = vmatprep.subr.bf16.mxu0 %v1966
    %3284 = vmatpush1.bf16.msra.mxu0 %v1965
    %3285 = vmatprep.mubr.bf16.mxu0 %v3164
    %3286 = vmatmul.mubr.bf16.gmra.mrb[0].mxu0 %v3163
    %v3287 = vpop.f32.mrb[0].mxu0
    %v3288 = vadd.f32 %v1510, %v3287
    %v3289 = vpop.f32.mrb[0].mxu0
    %v3290 = vadd.f32 %v1514, %v3289
    %v3291 = vpop.f32.mrb[0].mxu0
    %v3292 = vadd.f32 %v1510, %v3291
    %v3293 = vpop.f32.mrb[0].mxu0
    %v3294 = vadd.f32 %v1514, %v3293
    %3295 = vdwg.mxu0
    %3296 = vmatprep.subr.bf16.mxu0 %v1970
    %3297 = vmatpush1.bf16.msra.mxu0 %v1969
    %3298 = vmatprep.subr.bf16.mxu0 %v1974
    %3299 = vmatpush1.bf16.msra.mxu0 %v1973
    %3300 = vmatprep.subr.bf16.mxu0 %v1978
    %3301 = vmatpush1.bf16.msra.mxu0 %v1977
    %3302 = vmatprep.subr.bf16.mxu0 %v1982
    %3303 = vmatpush1.bf16.msra.mxu0 %v1981
    %3304 = vmatprep.subr.bf16.mxu0 %v1986
    %3305 = vmatpush1.bf16.msra.mxu0 %v1985
    %3306 = vmatprep.subr.bf16.mxu0 %v1990
    %3307 = vmatpush1.bf16.msra.mxu0 %v1989
    %3308 = vmatprep.subr.bf16.mxu0 %v1994
    %3309 = vmatpush1.bf16.msra.mxu0 %v1993
    %3310 = vmatprep.subr.bf16.mxu0 %v1998
    %3311 = vmatpush1.bf16.msra.mxu0 %v1997
    %3312 = vmatprep.subr.bf16.mxu0 %v2002
    %3313 = vmatpush1.bf16.msra.mxu0 %v2001
    %3314 = vmatprep.subr.bf16.mxu0 %v2006
    %3315 = vmatpush1.bf16.msra.mxu0 %v2005
    %3316 = vmatprep.subr.bf16.mxu0 %v2010
    %3317 = vmatpush1.bf16.msra.mxu0 %v2009
    %3318 = vmatprep.subr.bf16.mxu0 %v2014
    %3319 = vmatpush1.bf16.msra.mxu0 %v2013
    %3320 = vmatprep.subr.bf16.mxu0 %v2018
    %3321 = vmatpush1.bf16.msra.mxu0 %v2017
    %3322 = vmatprep.subr.bf16.mxu0 %v2022
    %3323 = vmatpush1.bf16.msra.mxu0 %v2021
    %3324 = vmatprep.subr.bf16.mxu0 %v2026
    %3325 = vmatpush1.bf16.msra.mxu0 %v2025
    %3326 = vmatprep.subr.bf16.mxu0 %v2030
    %3327 = vmatpush1.bf16.msra.mxu0 %v2029
    %3328 = vmatprep.mubr.bf16.mxu0 %v3166
    %3329 = vmatmul.mubr.bf16.gmra.mrb[0].mxu0 %v3165
    %v3330 = vpop.f32.mrb[0].mxu0
    %v3331 = vadd.f32 %v3288, %v3330
    %v3332 = vpop.f32.mrb[0].mxu0
    %v3333 = vadd.f32 %v3290, %v3332
    %v3334 = vpop.f32.mrb[0].mxu0
    %v3335 = vadd.f32 %v3292, %v3334
    %v3336 = vpop.f32.mrb[0].mxu0
    %v3337 = vadd.f32 %v3294, %v3336
    %3338 = vdwg.mxu0
    %3339 = vst [vmem:[#allocation10] sm:$0xff] %v3245
    %3340 = vst [vmem:[#allocation10 + $0x8] sm:$0xff] %v3247
    %3341 = vst [vmem:[#allocation10 + $0x10] sm:$0xff] %v3331
    %3342 = vst [vmem:[#allocation10 + $0x18] sm:$0xff] %v3333
    %3343 = vst [vmem:[#allocation10 + $0x20] sm:$0xff] %v3249
    %3344 = vst [vmem:[#allocation10 + $0x28] sm:$0xff] %v3251
    %3345 = vst [vmem:[#allocation10 + $0x30] sm:$0xff] %v3335
    %3346 = vst [vmem:[#allocation10 + $0x38] sm:$0xff] %v3337
    // Predicated region
    $region42: #{tpu_custom_call.1} parent=1 // pred_check
      _
    $region43: #{tpu_custom_call.1} parent=1 // pred_check_branch
      %3348 = sbr.rel (0) target = $region45
    $region44: #{tpu_custom_call.1} parent=1 // pred_region
      %s3350 = ssub.s32 1024, 1024
      %3351 = vsyncadd [#allocation4], %s3350
      %s3352 = sshll.u32 [#allocation10], 4
      %s3353 = int_to_ptr.vmem [resolvable:$true] %s3352
      %3358 = dma.vmem_to_hbm [thread:$0]  %s3353, 1024, %s6, [#allocation4], 512, 512, 32
    $region45: #{tpu_custom_call.1} parent=1 // pred_fallthru
      _
    // Predicated region
    $region46: #{tpu_custom_call.1} parent=1 // pred_check
      _
    $region47: #{tpu_custom_call.1} parent=1 // pred_check_branch
      %3360 = sbr.rel (0) target = $region49
    $region48: #{tpu_custom_call.1} parent=1 // pred_region
      %3361 = dma.done [#allocation4], 1024
    $region49: #{tpu_custom_call.1} parent=1 // pred_fallthru
      _
    %3362 = vsyncpa [#allocation3], 1
    %3363 = vsyncpa [#allocation6], 1
    %3364 = vsyncpa [#allocation9], 1
    %3365 = vsyncpa [#allocation4], 1

</llo_original>
